<compile_context>
chip_gen: v5e
topology: v5e:2x2
jax: 0.10.0
libtpu: 0.0.40
codegen_flags: <defaults>
</compile_context>

<pallas_src>
import functools

import jax
import jax.numpy as jnp
from jax.experimental import pallas as pl
from jax.experimental.pallas import tpu as pltpu


_NEG = jnp.float32(-1e30)          # finite "minus infinity" used for padding
_VMEM_LIMIT = 48 * 1024 * 1024     # safe on v7x (64 MiB phys); fine on v5e/v6e


def _round_up(x, m):
    return ((x + m - 1) // m) * m


# ---------------------------------------------------------------------------
# Pass 0 (prologue, T grid only): cross-attention head sum + pointer gate.
# ---------------------------------------------------------------------------
def prologue_kernel(
    cross_ref,    # (NH, tT, S) cross_attentions[-1].squeeze(0), T-tile
    encw_ref,     # (1, S)      enc_hidden @ W[:H], pre-reassociated
    dech_ref,     # (tT, H)     decoder_hidden_states[-1]
    dece_ref,     # (tT, H)     decoder_hidden_states[0]
    wdh_ref,      # (1, H)      W[H:2H]
    wde_ref,      # (1, H)      W[2H:3H]
    b_ref,        # (1, 1)      bias
    csum_out,     # (tT, S)     cross_attention_sum (f32)
    gen_out,      # (tT, 1)     gen_probs
):
    # sum over heads / 16 (divisor hard-coded exactly as in the PyTorch module)
    cs = jnp.sum(cross_ref[...].astype(jnp.float32), axis=0) * (1.0 / 16.0)
    csum_out[...] = cs
    # Pointer linear: all three terms as VPU multiply + lane reduce
    # (keeps the MXU free; avoids N=1 systolic-array passes).
    lin = (jnp.sum(cs * encw_ref[...], axis=1, keepdims=True)
           + jnp.sum(dech_ref[...].astype(jnp.float32) * wdh_ref[...],
                     axis=1, keepdims=True)
           + jnp.sum(dece_ref[...].astype(jnp.float32) * wde_ref[...],
                     axis=1, keepdims=True)
           + b_ref[...])                                               # (tT, 1)
    gen_out[...] = jax.nn.sigmoid(lin)


# ---------------------------------------------------------------------------
# Pass 1 (T x V1 grid, V "arbitrary"): online softmax statistics over logits.
# Streams ONLY the logits; nothing else is held resident.
# ---------------------------------------------------------------------------
def stats_kernel(
    logits_ref,   # (tT, tV1) lm logits tile
    m_out,        # (tT, 1)   running row max
    l_out,        # (tT, 1)   running row sum of exp(logits - m)
):
    @pl.when(pl.program_id(1) == 0)
    def _init():
        m_out[...] = jnp.full_like(m_out, -jnp.inf)
        l_out[...] = jnp.zeros_like(l_out)

    lt = logits_ref[...].astype(jnp.float32)
    m_prev = m_out[...]
    m_new = jnp.maximum(m_prev, jnp.max(lt, axis=1, keepdims=True))
    l_out[...] = (l_out[...] * jnp.exp(m_prev - m_new)
                  + jnp.sum(jnp.exp(lt - m_new), axis=1, keepdims=True))
    m_out[...] = m_new


# ---------------------------------------------------------------------------
# Pass 2 (T x V2 grid, both "parallel"): normalized softmax tile, gated
# in-kernel one-hot copy matmul (skipped on vocab tiles with no input_ids),
# lane-dense (tT, tV2) output stores.
# ---------------------------------------------------------------------------
def output_kernel(
    counts_ref,   # (nV2,) int32 SMEM (scalar prefetch): #input_ids per V tile
    ids_ref,      # (S, 1) int32: input_ids with non-last occurrences -> -1
    csum_ref,     # (tT, S) cross_attention_sum (from pass 0)
    gen_ref,      # (tT, 1) gen_probs
    m_ref,        # (tT, 1) global row max
    l_ref,        # (tT, 1) global row sum of exp
    logits_ref,   # (tT, tV2) lm logits tile
    final_ref,    # (tT, tV2) final_probs tile
):
    j = pl.program_id(1)
    tV = logits_ref.shape[1]

    lt = logits_ref[...].astype(jnp.float32)
    inv_l = pl.reciprocal(l_ref[...], approx=False)
    dist = jnp.exp(lt - m_ref[...]) * inv_l                 # softmax tile
    gen = gen_ref[...]                                      # (tT, 1)
    final_ref[...] = (gen * dist).astype(final_ref.dtype)

    # Copy distribution: only for the few vocab tiles that actually contain an
    # input id. onehot[s, v] = (ids_masked[s] == j*tV + v); -1 never matches,
    # so last-write-wins scatter semantics are reproduced exactly.
    @pl.when(counts_ref[j] > 0)
    def _copy():
        S = csum_ref.shape[1]
        cols = jax.lax.broadcasted_iota(jnp.int32, (S, tV), 1) + j * tV
        onehot = (cols == ids_ref[...]).astype(jnp.float32)            # (S, tV)
        copy = jnp.dot(csum_ref[...], onehot,
                       preferred_element_type=jnp.float32)             # (tT, tV)
        final_ref[...] = (final_ref[...]
                          + (1.0 - gen) * copy).astype(final_ref.dtype)


# ---------------------------------------------------------------------------
# Wrapper
# ---------------------------------------------------------------------------
@functools.partial(jax.jit, static_argnames=("t_tile", "v_tile", "v_tile_p1"))
def pointer_pegasus_forward(cross_attn, enc_hidden, dec_hidden, dec_embed,
                            logits, input_ids, pointer_w, pointer_b,
                            *, t_tile=128, v_tile=2048, v_tile_p1=8192):
    NH, T, S = cross_attn.shape
    H = enc_hidden.shape[1]
    V = logits.shape[1]
    f32 = jnp.float32

    # ---- tile selection (tiles must be multiples of (8, 128) or full-extent)
    T_pad8 = _round_up(T, 8)
    t = min(_round_up(t_tile, 8), T_pad8)
    if T_pad8 > 8:
        # keep at least 2 T-tiles so the "parallel" axis can use both cores
        t = min(t, _round_up(pl.cdiv(T_pad8, 2), 8))
    T_pad = _round_up(T_pad8, t)
    nT = T_pad // t

    V128 = _round_up(V, 128)
    v2 = min(_round_up(v_tile, 128), V128)        # pass-2 vocab tile
    v1 = min(_round_up(v_tile_p1, 128), V128)     # pass-1 vocab tile (bigger)
    v1 = max(v2, (v1 // v2) * v2)                 # make v1 a multiple of v2
    V_pad = _round_up(V, v1)
    nV1 = V_pad // v1
    nV2 = V_pad // v2

    # ---- padding (padded logits -> large negative => zero softmax mass)
    logits_f = logits.astype(f32)
    if (T_pad, V_pad) != (T, V):
        logits_p = jnp.full((T_pad, V_pad), _NEG, f32).at[:T, :V].set(logits_f)
    else:
        logits_p = logits_f
    if T_pad != T:
        cross_p = jnp.zeros((NH, T_pad, S), cross_attn.dtype
                            ).at[:, :T, :].set(cross_attn)
        dech_p = jnp.zeros((T_pad, H), dec_hidden.dtype).at[:T].set(dec_hidden)
        dece_p = jnp.zeros((T_pad, H), dec_embed.dtype).at[:T].set(dec_embed)
    else:
        cross_p, dech_p, dece_p = cross_attn, dec_hidden, dec_embed

    # ---- reassociated pointer-linear pieces (tiny O(S*H) precompute)
    enc_w = (enc_hidden.astype(f32) @ pointer_w[:H].astype(f32)).reshape(1, S)
    w_dh = pointer_w[H:2 * H].astype(f32).reshape(1, H)
    w_de = pointer_w[2 * H:3 * H].astype(f32).reshape(1, H)
    bias = pointer_b.astype(f32).reshape(1, 1)

    # Last-occurrence ids in O(S + V): non-last occurrences become -1 so the
    # in-kernel iota compare reproduces torch's last-write-wins scatter.
    ids32 = input_ids.astype(jnp.int32)
    pos = jnp.arange(S, dtype=jnp.int32)
    last_pos = jnp.full((V,), -1, jnp.int32).at[ids32].max(pos)
    ids_masked = jnp.where(last_pos[ids32] == pos, ids32, -1).reshape(S, 1)

    # Per-pass-2-tile hit counts (scalar prefetch -> SMEM): lets the kernel
    # skip the one-hot/copy matmul on the ~99% of tiles with no input id.
    counts = jnp.zeros((nV2,), jnp.int32).at[ids32 // v2].add(1)

    # ---- pass 0: prologue over T tiles only --------------------------------
    csum, gen_probs_p = pl.pallas_call(
        prologue_kernel,
        out_shape=(
            jax.ShapeDtypeStruct((T_pad, S), f32),
            jax.ShapeDtypeStruct((T_pad, 1), f32),
        ),
        grid_spec=pltpu.PrefetchScalarGridSpec(
            num_scalar_prefetch=0,
            grid=(nT,),
            in_specs=[
                pl.BlockSpec((NH, t, S), lambda i: (0, i, 0)),
                pl.BlockSpec((1, S), lambda i: (0, 0)),
                pl.BlockSpec((t, H), lambda i: (i, 0)),
                pl.BlockSpec((t, H), lambda i: (i, 0)),
                pl.BlockSpec((1, H), lambda i: (0, 0)),
                pl.BlockSpec((1, H), lambda i: (0, 0)),
                pl.BlockSpec((1, 1), lambda i: (0, 0)),
            ],
            out_specs=(
                pl.BlockSpec((t, S), lambda i: (i, 0)),
                pl.BlockSpec((t, 1), lambda i: (i, 0)),
            ),
        ),
        compiler_params=pltpu.CompilerParams(
            dimension_semantics=("parallel",),
            vmem_limit_bytes=_VMEM_LIMIT),
    )(cross_p, enc_w, dech_p, dece_p, w_dh, w_de, bias)

    # ---- pass 1: softmax stats, streams only the logits --------------------
    m_row, l_row = pl.pallas_call(
        stats_kernel,
        out_shape=(
            jax.ShapeDtypeStruct((T_pad, 1), f32),
            jax.ShapeDtypeStruct((T_pad, 1), f32),
        ),
        grid_spec=pltpu.PrefetchScalarGridSpec(
            num_scalar_prefetch=0,
            grid=(nT, nV1),
            in_specs=[pl.BlockSpec((t, v1), lambda i, j: (i, j))],
            out_specs=(
                pl.BlockSpec((t, 1), lambda i, j: (i, 0)),
                pl.BlockSpec((t, 1), lambda i, j: (i, 0)),
            ),
        ),
        compiler_params=pltpu.CompilerParams(
            dimension_semantics=("parallel", "arbitrary"),
            vmem_limit_bytes=_VMEM_LIMIT),
    )(logits_p)

    # ---- pass 2: normalized softmax + gated copy + combine -----------------
    final_p = pl.pallas_call(
        output_kernel,
        out_shape=jax.ShapeDtypeStruct((T_pad, V_pad), f32),
        grid_spec=pltpu.PrefetchScalarGridSpec(
            num_scalar_prefetch=1,
            grid=(nT, nV2),
            in_specs=[
                pl.BlockSpec((S, 1), lambda i, j, c: (0, 0)),
                pl.BlockSpec((t, S), lambda i, j, c: (i, 0)),
                pl.BlockSpec((t, 1), lambda i, j, c: (i, 0)),
                pl.BlockSpec((t, 1), lambda i, j, c: (i, 0)),
                pl.BlockSpec((t, 1), lambda i, j, c: (i, 0)),
                pl.BlockSpec((t, v2), lambda i, j, c: (i, j)),
            ],
            out_specs=pl.BlockSpec((t, v2), lambda i, j, c: (i, j)),
        ),
        compiler_params=pltpu.CompilerParams(
            dimension_semantics=("parallel", "parallel"),
            vmem_limit_bytes=_VMEM_LIMIT),
    )(counts, ids_masked, csum, gen_probs_p, m_row, l_row, logits_p)

    return gen_probs_p[:T], final_p[:T, :V]


# ---------------------------------------------------------------------------
# Pure-JAX reference mirroring the PyTorch forward semantics.
# ---------------------------------------------------------------------------
def reference_forward(cross_attn, enc_hidden, dec_hidden, dec_embed,
                      logits, input_ids, pointer_w, pointer_b):
    cross_sum = jnp.sum(cross_attn, axis=0) / 16.0
    h = cross_sum @ enc_hidden
    lin_in = jnp.concatenate([h, dec_hidden, dec_embed], axis=1)
    lin = lin_in @ pointer_w + pointer_b[0]
    gen_probs = jax.nn.sigmoid(lin)
    dist = jax.nn.softmax(logits, axis=1)
    gen_logits = gen_probs * dist
    T, V = logits.shape
    copy = jnp.zeros((T, V), jnp.float32)
    for s in range(input_ids.shape[0]):          # sequential: last write wins
        copy = copy.at[:, input_ids[s]].set(cross_sum[:, s])
    copy = (1.0 - gen_probs) * copy
    return gen_probs, gen_logits + copy


if __name__ == "__main__":
    # Small synthetic shapes consistent with the module's forward:
    # batch=1 (squeezed), decoder length T=14 (exercises T padding),
    # encoder length S=16, hidden H=32, heads NH=4, vocab V=2000 (exercises
    # V padding and multiple vocab tiles; ids confined to [0, 500) so the
    # empty-tile skip path in pass 2 is actually taken).
    T, S, H, NH, V = 14, 16, 32, 4, 2000

    key = jax.random.PRNGKey(0)
    ks = jax.random.split(key, 8)

    # TODO(synk): synthesized stand-ins for PegasusForConditionalGeneration outputs.
    cross_attn = jax.nn.softmax(
        jax.random.normal(ks[0], (NH, T, S), jnp.float32), axis=-1)
    enc_hidden = jax.random.normal(ks[1], (S, H), jnp.float32)
    dec_hidden = jax.random.normal(ks[2], (T, H), jnp.float32)
    dec_embed = jax.random.normal(ks[3], (T, H), jnp.float32)
    logits = jax.random.normal(ks[4], (T, V), jnp.float32)
    input_ids = jax.random.randint(ks[5], (S,), 0, 500, jnp.int32)
    # Force a duplicate token id to exercise last-write-wins semantics.
    input_ids = input_ids.at[3].set(input_ids[10])

    # Deterministic Pointer = nn.Linear(3H, 1) parameters.
    pointer_w = (jax.random.normal(ks[6], (3 * H, 1), jnp.float32)
                 / jnp.sqrt(3.0 * H))
    pointer_b = jax.random.normal(ks[7], (1,), jnp.float32) * 0.1

    # Small tiles here so the test exercises multiple T and V tiles (and the
    # empty-tile skip); at real Pegasus sizes use the defaults (128/2048/8192).
    gen_probs, final_probs = pointer_pegasus_forward(
        cross_attn, enc_hidden, dec_hidden, dec_embed, logits, input_ids,
        pointer_w, pointer_b, t_tile=128, v_tile=256, v_tile_p1=512)
    jax.block_until_ready((gen_probs, final_probs))

    ref_gen, ref_final = reference_forward(
        cross_attn, enc_hidden, dec_hidden, dec_embed, logits, input_ids,
        pointer_w, pointer_b)

    assert gen_probs.shape == (T, 1) and final_probs.shape == (T, V)
    assert jnp.allclose(gen_probs, ref_gen, atol=1e-5, rtol=1e-5)
    assert jnp.allclose(final_probs, ref_final, atol=1e-5, rtol=1e-3)
    print("KERNEL_OK")
</pallas_src>

<mosaic_0001>
module attributes {stable_mosaic.version = 11 : i64} {
  func.func @prologue_kernel(%arg0: i32, %arg1: memref<4x8x16xf32, #tpu.memory_space<vmem>>, %arg2: memref<1x16xf32, #tpu.memory_space<vmem>>, %arg3: memref<8x32xf32, #tpu.memory_space<vmem>>, %arg4: memref<8x32xf32, #tpu.memory_space<vmem>>, %arg5: memref<1x32xf32, #tpu.memory_space<vmem>>, %arg6: memref<1x32xf32, #tpu.memory_space<vmem>>, %arg7: memref<1x1xf32, #tpu.memory_space<vmem>>, %arg8: memref<8x16xf32, #tpu.memory_space<vmem>>, %arg9: memref<8x1xf32, #tpu.memory_space<vmem>>) attributes {dimension_semantics = [#tpu.dimension_semantics<parallel>], iteration_bounds = array<i64: 2>, scalar_prefetch = 0 : i64, scratch_operands = 0 : i64, tpu.core_type = #tpu.core_type<tc>, window_params = [{transform_indices = @transform_0, window_bounds = array<i64: 4, 8, 16>}, {pipeline_mode = #tpu.pipeline_mode<synchronous>, transform_indices = @transform_1, window_bounds = array<i64: 1, 16>}, {transform_indices = @transform_2, window_bounds = array<i64: 8, 32>}, {transform_indices = @transform_3, window_bounds = array<i64: 8, 32>}, {pipeline_mode = #tpu.pipeline_mode<synchronous>, transform_indices = @transform_4, window_bounds = array<i64: 1, 32>}, {pipeline_mode = #tpu.pipeline_mode<synchronous>, transform_indices = @transform_5, window_bounds = array<i64: 1, 32>}, {pipeline_mode = #tpu.pipeline_mode<synchronous>, transform_indices = @transform_6, window_bounds = array<i64: 1, 1>}, {transform_indices = @transform_7, window_bounds = array<i64: 8, 16>}, {transform_indices = @transform_8, window_bounds = array<i64: 8, 1>}]} {
    %c0 = arith.constant 0 : index
    %c0_0 = arith.constant 0 : index
    %c0_1 = arith.constant 0 : index
    %0 = vector.load %arg1[%c0, %c0_0, %c0_1] : memref<4x8x16xf32, #tpu.memory_space<vmem>>, vector<4x8x16xf32>
    %cst = arith.constant dense<0.000000e+00> : vector<8x16xf32>
    %1 = vector.multi_reduction <add>, %0, %cst [0] : vector<4x8x16xf32> to vector<8x16xf32>
    %cst_2 = arith.constant 6.250000e-02 : f32
    %2 = vector.broadcast %cst_2 : f32 to vector<8x16xf32>
    %3 = arith.mulf %1, %2 : vector<8x16xf32>
    %c0_3 = arith.constant 0 : index
    %c0_4 = arith.constant 0 : index
    %4 = vector.load %arg8[%c0_3, %c0_4] : memref<8x16xf32, #tpu.memory_space<vmem>>, vector<8x16xf32>
    tpu.vector_store %arg8[%c0_3, %c0_4], %3 {strides = array<i32>} : memref<8x16xf32, #tpu.memory_space<vmem>>, vector<8x16xf32>,
    %c0_5 = arith.constant 0 : index
    %c0_6 = arith.constant 0 : index
    %5 = vector.load %arg2[%c0_5, %c0_6] : memref<1x16xf32, #tpu.memory_space<vmem>>, vector<1x16xf32>
    %6 = vector.broadcast %5 : vector<1x16xf32> to vector<8x16xf32>
    %7 = arith.mulf %3, %6 : vector<8x16xf32>
    %cst_7 = arith.constant dense<0.000000e+00> : vector<8xf32>
    %8 = vector.multi_reduction <add>, %7, %cst_7 [1] : vector<8x16xf32> to vector<8xf32>
    %9 = vector.shape_cast %8 : vector<8xf32> to vector<8x1xf32>
    %c0_8 = arith.constant 0 : index
    %c0_9 = arith.constant 0 : index
    %10 = vector.load %arg3[%c0_8, %c0_9] : memref<8x32xf32, #tpu.memory_space<vmem>>, vector<8x32xf32>
    %c0_10 = arith.constant 0 : index
    %c0_11 = arith.constant 0 : index
    %11 = vector.load %arg5[%c0_10, %c0_11] : memref<1x32xf32, #tpu.memory_space<vmem>>, vector<1x32xf32>
    %12 = vector.broadcast %11 : vector<1x32xf32> to vector<8x32xf32>
    %13 = arith.mulf %10, %12 : vector<8x32xf32>
    %cst_12 = arith.constant dense<0.000000e+00> : vector<8xf32>
    %14 = vector.multi_reduction <add>, %13, %cst_12 [1] : vector<8x32xf32> to vector<8xf32>
    %15 = vector.shape_cast %14 : vector<8xf32> to vector<8x1xf32>
    %16 = arith.addf %9, %15 : vector<8x1xf32>
    %c0_13 = arith.constant 0 : index
    %c0_14 = arith.constant 0 : index
    %17 = vector.load %arg4[%c0_13, %c0_14] : memref<8x32xf32, #tpu.memory_space<vmem>>, vector<8x32xf32>
    %c0_15 = arith.constant 0 : index
    %c0_16 = arith.constant 0 : index
    %18 = vector.load %arg6[%c0_15, %c0_16] : memref<1x32xf32, #tpu.memory_space<vmem>>, vector<1x32xf32>
    %19 = vector.broadcast %18 : vector<1x32xf32> to vector<8x32xf32>
    %20 = arith.mulf %17, %19 : vector<8x32xf32>
    %cst_17 = arith.constant dense<0.000000e+00> : vector<8xf32>
    %21 = vector.multi_reduction <add>, %20, %cst_17 [1] : vector<8x32xf32> to vector<8xf32>
    %22 = vector.shape_cast %21 : vector<8xf32> to vector<8x1xf32>
    %23 = arith.addf %16, %22 : vector<8x1xf32>
    %c0_18 = arith.constant 0 : index
    %c0_19 = arith.constant 0 : index
    %24 = vector.load %arg7[%c0_18, %c0_19] : memref<1x1xf32, #tpu.memory_space<vmem>>, vector<1x1xf32>
    %25 = vector.broadcast %24 : vector<1x1xf32> to vector<8x1xf32>
    %26 = arith.addf %23, %25 : vector<8x1xf32>
    %27 = arith.negf %26 : vector<8x1xf32>
    %28 = math.exp %27 : vector<8x1xf32>
    %cst_20 = arith.constant 1.000000e+00 : f32
    %29 = vector.broadcast %cst_20 : f32 to vector<8x1xf32>
    %30 = arith.addf %29, %28 : vector<8x1xf32>
    %31 = arith.divf %29, %30 : vector<8x1xf32>
    %c0_21 = arith.constant 0 : index
    %c0_22 = arith.constant 0 : index
    %32 = vector.load %arg9[%c0_21, %c0_22] : memref<8x1xf32, #tpu.memory_space<vmem>>, vector<8x1xf32>
    tpu.vector_store %arg9[%c0_21, %c0_22], %31 {strides = array<i32>} : memref<8x1xf32, #tpu.memory_space<vmem>>, vector<8x1xf32>,
    return
  }
  func.func @transform_0(%arg0: i32) -> (i32, i32, i32) {
    %c0_i32 = arith.constant 0 : i32
    %c0_i32_0 = arith.constant 0 : i32
    %c0_i32_1 = arith.constant 0 : i32
    return %c0_i32, %arg0, %c0_i32_0 : i32, i32, i32
  }
  func.func @transform_1(%arg0: i32) -> (i32, i32) {
    %c0_i32 = arith.constant 0 : i32
    %c0_i32_0 = arith.constant 0 : i32
    %c0_i32_1 = arith.constant 0 : i32
    return %c0_i32, %c0_i32_0 : i32, i32
  }
  func.func @transform_2(%arg0: i32) -> (i32, i32) {
    %c0_i32 = arith.constant 0 : i32
    %c0_i32_0 = arith.constant 0 : i32
    return %arg0, %c0_i32 : i32, i32
  }
  func.func @transform_3(%arg0: i32) -> (i32, i32) {
    %c0_i32 = arith.constant 0 : i32
    %c0_i32_0 = arith.constant 0 : i32
    return %arg0, %c0_i32 : i32, i32
  }
  func.func @transform_4(%arg0: i32) -> (i32, i32) {
    %c0_i32 = arith.constant 0 : i32
    %c0_i32_0 = arith.constant 0 : i32
    %c0_i32_1 = arith.constant 0 : i32
    return %c0_i32, %c0_i32_0 : i32, i32
  }
  func.func @transform_5(%arg0: i32) -> (i32, i32) {
    %c0_i32 = arith.constant 0 : i32
    %c0_i32_0 = arith.constant 0 : i32
    %c0_i32_1 = arith.constant 0 : i32
    return %c0_i32, %c0_i32_0 : i32, i32
  }
  func.func @transform_6(%arg0: i32) -> (i32, i32) {
    %c0_i32 = arith.constant 0 : i32
    %c0_i32_0 = arith.constant 0 : i32
    %c0_i32_1 = arith.constant 0 : i32
    return %c0_i32, %c0_i32_0 : i32, i32
  }
  func.func @transform_7(%arg0: i32) -> (i32, i32) {
    %c0_i32 = arith.constant 0 : i32
    %c0_i32_0 = arith.constant 0 : i32
    return %arg0, %c0_i32 : i32, i32
  }
  func.func @transform_8(%arg0: i32) -> (i32, i32) {
    %c0_i32 = arith.constant 0 : i32
    %c0_i32_0 = arith.constant 0 : i32
    return %arg0, %c0_i32 : i32, i32
  }
}

module attributes {stable_mosaic.version = 11 : i64} {
  func.func @output_kernel(%arg0: i32, %arg1: i32, %arg2: memref<8xi32, #tpu.memory_space<smem>>, %arg3: memref<16x1xi32, #tpu.memory_space<vmem>>, %arg4: memref<8x16xf32, #tpu.memory_space<vmem>>, %arg5: memref<8x1xf32, #tpu.memory_space<vmem>>, %arg6: memref<8x1xf32, #tpu.memory_space<vmem>>, %arg7: memref<8x1xf32, #tpu.memory_space<vmem>>, %arg8: memref<8x256xf32, #tpu.memory_space<vmem>>, %arg9: memref<8x256xf32, #tpu.memory_space<vmem>>) attributes {dimension_semantics = [#tpu.dimension_semantics<parallel>, #tpu.dimension_semantics<parallel>], iteration_bounds = array<i64: 2, 8>, scalar_prefetch = 1 : i64, scratch_operands = 0 : i64, tpu.core_type = #tpu.core_type<tc>, window_params = [{pipeline_mode = #tpu.pipeline_mode<synchronous>, transform_indices = @transform_0, window_bounds = array<i64: 16, 1>}, {transform_indices = @transform_1, window_bounds = array<i64: 8, 16>}, {transform_indices = @transform_2, window_bounds = array<i64: 8, 1>}, {transform_indices = @transform_3, window_bounds = array<i64: 8, 1>}, {transform_indices = @transform_4, window_bounds = array<i64: 8, 1>}, {transform_indices = @transform_5, window_bounds = array<i64: 8, 256>}, {transform_indices = @transform_6, window_bounds = array<i64: 8, 256>}]} {
    %c0 = arith.constant 0 : index
    %c0_0 = arith.constant 0 : index
    %0 = vector.load %arg8[%c0, %c0_0] : memref<8x256xf32, #tpu.memory_space<vmem>>, vector<8x256xf32>
    %c0_1 = arith.constant 0 : index
    %c0_2 = arith.constant 0 : index
    %1 = vector.load %arg7[%c0_1, %c0_2] : memref<8x1xf32, #tpu.memory_space<vmem>>, vector<8x1xf32>
    %2 = tpu.reciprocal %1 : vector<8x1xf32> -> vector<8x1xf32>
    %c0_3 = arith.constant 0 : index
    %c0_4 = arith.constant 0 : index
    %3 = vector.load %arg6[%c0_3, %c0_4] : memref<8x1xf32, #tpu.memory_space<vmem>>, vector<8x1xf32>
    %4 = vector.broadcast %3 : vector<8x1xf32> to vector<8x256xf32>
    %5 = arith.subf %0, %4 : vector<8x256xf32>
    %6 = math.exp %5 : vector<8x256xf32>
    %7 = vector.broadcast %2 : vector<8x1xf32> to vector<8x256xf32>
    %8 = arith.mulf %6, %7 : vector<8x256xf32>
    %c0_5 = arith.constant 0 : index
    %c0_6 = arith.constant 0 : index
    %9 = vector.load %arg5[%c0_5, %c0_6] : memref<8x1xf32, #tpu.memory_space<vmem>>, vector<8x1xf32>
    %10 = vector.broadcast %9 : vector<8x1xf32> to vector<8x256xf32>
    %11 = arith.mulf %10, %8 : vector<8x256xf32>
    %c0_7 = arith.constant 0 : index
    %c0_8 = arith.constant 0 : index
    %12 = vector.load %arg9[%c0_7, %c0_8] : memref<8x256xf32, #tpu.memory_space<vmem>>, vector<8x256xf32>
    tpu.vector_store %arg9[%c0_7, %c0_8], %11 {strides = array<i32>} : memref<8x256xf32, #tpu.memory_space<vmem>>, vector<8x256xf32>,
    %13 = arith.index_cast %arg1 : i32 to index
    %14 = memref.load %arg2[%13] : memref<8xi32, #tpu.memory_space<smem>>
    %c0_i32 = arith.constant 0 : i32
    %15 = arith.cmpi sgt, %14, %c0_i32 : i32
    %16 = arith.extui %15 : i1 to i32
    %c0_i32_9 = arith.constant 0 : i32
    %17 = arith.cmpi ne, %16, %c0_i32_9 : i32
    scf.if %17 {
      %18 = tpu.iota {dimensions = array<i32: 1>} : vector<16x256xi32>
      %c256_i32 = arith.constant 256 : i32
      %19 = arith.muli %arg1, %c256_i32 : i32
      %20 = vector.broadcast %19 : i32 to vector<16x256xi32>
      %21 = arith.addi %18, %20 : vector<16x256xi32>
      %c0_10 = arith.constant 0 : index
      %c0_11 = arith.constant 0 : index
      %22 = vector.load %arg3[%c0_10, %c0_11] : memref<16x1xi32, #tpu.memory_space<vmem>>, vector<16x1xi32>
      %23 = vector.broadcast %22 : vector<16x1xi32> to vector<16x256xi32>
      %24 = arith.cmpi eq, %21, %23 : vector<16x256xi32>
      %25 = arith.extui %24 : vector<16x256xi1> to vector<16x256xi32>
      %26 = arith.sitofp %25 : vector<16x256xi32> to vector<16x256xf32>
      %c0_12 = arith.constant 0 : index
      %c0_13 = arith.constant 0 : index
      %27 = vector.load %arg4[%c0_12, %c0_13] : memref<8x16xf32, #tpu.memory_space<vmem>>, vector<8x16xf32>
      %cst = arith.constant dense<0.000000e+00> : vector<8x256xf32>
      %28 = tpu.matmul %27, %26, %cst {dimension_numbers = #tpu.dot_dimension_numbers<[1], [0], [0], [1], [0, 0, 1, 1], [], []>} : vector<8x16xf32>, vector<16x256xf32>, vector<8x256xf32> -> vector<8x256xf32>
      %c0_14 = arith.constant 0 : index
      %c0_15 = arith.constant 0 : index
      %29 = vector.load %arg9[%c0_14, %c0_15] : memref<8x256xf32, #tpu.memory_space<vmem>>, vector<8x256xf32>
      %cst_16 = arith.constant 1.000000e+00 : f32
      %30 = vector.broadcast %cst_16 : f32 to vector<8x1xf32>
      %31 = arith.subf %30, %9 : vector<8x1xf32>
      %32 = vector.broadcast %31 : vector<8x1xf32> to vector<8x256xf32>
      %33 = arith.mulf %32, %28 : vector<8x256xf32>
      %34 = arith.addf %29, %33 : vector<8x256xf32>
      %c0_17 = arith.constant 0 : index
      %c0_18 = arith.constant 0 : index
      %35 = vector.load %arg9[%c0_17, %c0_18] : memref<8x256xf32, #tpu.memory_space<vmem>>, vector<8x256xf32>
      tpu.vector_store %arg9[%c0_17, %c0_18], %34 {strides = array<i32>} : memref<8x256xf32, #tpu.memory_space<vmem>>, vector<8x256xf32>,
    } else {
    }
    return
  }
  func.func @transform_0(%arg0: i32, %arg1: i32, %arg2: memref<8xi32, #tpu.memory_space<smem>>) -> (i32, i32) {
    %c0_i32 = arith.constant 0 : i32
    %c0_i32_0 = arith.constant 0 : i32
    %c0_i32_1 = arith.constant 0 : i32
    return %c0_i32, %c0_i32_0 : i32, i32
  }
  func.func @transform_1(%arg0: i32, %arg1: i32, %arg2: memref<8xi32, #tpu.memory_space<smem>>) -> (i32, i32) {
    %c0_i32 = arith.constant 0 : i32
    %c0_i32_0 = arith.constant 0 : i32
    return %arg0, %c0_i32 : i32, i32
  }
  func.func @transform_2(%arg0: i32, %arg1: i32, %arg2: memref<8xi32, #tpu.memory_space<smem>>) -> (i32, i32) {
    %c0_i32 = arith.constant 0 : i32
    %c0_i32_0 = arith.constant 0 : i32
    return %arg0, %c0_i32 : i32, i32
  }
  func.func @transform_3(%arg0: i32, %arg1: i32, %arg2: memref<8xi32, #tpu.memory_space<smem>>) -> (i32, i32) {
    %c0_i32 = arith.constant 0 : i32
    %c0_i32_0 = arith.constant 0 : i32
    return %arg0, %c0_i32 : i32, i32
  }
  func.func @transform_4(%arg0: i32, %arg1: i32, %arg2: memref<8xi32, #tpu.memory_space<smem>>) -> (i32, i32) {
    %c0_i32 = arith.constant 0 : i32
    %c0_i32_0 = arith.constant 0 : i32
    return %arg0, %c0_i32 : i32, i32
  }
  func.func @transform_5(%arg0: i32, %arg1: i32, %arg2: memref<8xi32, #tpu.memory_space<smem>>) -> (i32, i32) {
    %c0_i32 = arith.constant 0 : i32
    return %arg0, %arg1 : i32, i32
  }
  func.func @transform_6(%arg0: i32, %arg1: i32, %arg2: memref<8xi32, #tpu.memory_space<smem>>) -> (i32, i32) {
    %c0_i32 = arith.constant 0 : i32
    return %arg0, %arg1 : i32, i32
  }
}

module attributes {stable_mosaic.version = 11 : i64} {
  func.func @stats_kernel(%arg0: i32, %arg1: i32, %arg2: memref<8x512xf32, #tpu.memory_space<vmem>>, %arg3: memref<8x1xf32, #tpu.memory_space<vmem>>, %arg4: memref<8x1xf32, #tpu.memory_space<vmem>>) attributes {dimension_semantics = [#tpu.dimension_semantics<parallel>, #tpu.dimension_semantics<arbitrary>], iteration_bounds = array<i64: 2, 4>, scalar_prefetch = 0 : i64, scratch_operands = 0 : i64, tpu.core_type = #tpu.core_type<tc>, window_params = [{transform_indices = @transform_0, window_bounds = array<i64: 8, 512>}, {transform_indices = @transform_1, window_bounds = array<i64: 8, 1>}, {transform_indices = @transform_2, window_bounds = array<i64: 8, 1>}]} {
    %c0_i32 = arith.constant 0 : i32
    %0 = arith.cmpi eq, %arg1, %c0_i32 : i32
    %1 = arith.extui %0 : i1 to i32
    %c0_i32_0 = arith.constant 0 : i32
    %2 = arith.cmpi ne, %1, %c0_i32_0 : i32
    scf.if %2 {
      %cst_11 = arith.constant 0xFF800000 : f32
      %20 = vector.broadcast %cst_11 : f32 to vector<8x1xf32>
      %c0_12 = arith.constant 0 : index
      %c0_13 = arith.constant 0 : index
      %21 = vector.load %arg3[%c0_12, %c0_13] : memref<8x1xf32, #tpu.memory_space<vmem>>, vector<8x1xf32>
      tpu.vector_store %arg3[%c0_12, %c0_13], %20 {strides = array<i32>} : memref<8x1xf32, #tpu.memory_space<vmem>>, vector<8x1xf32>,
      %cst_14 = arith.constant 0.000000e+00 : f32
      %22 = vector.broadcast %cst_14 : f32 to vector<8x1xf32>
      %c0_15 = arith.constant 0 : index
      %c0_16 = arith.constant 0 : index
      %23 = vector.load %arg4[%c0_15, %c0_16] : memref<8x1xf32, #tpu.memory_space<vmem>>, vector<8x1xf32>
      tpu.vector_store %arg4[%c0_15, %c0_16], %22 {strides = array<i32>} : memref<8x1xf32, #tpu.memory_space<vmem>>, vector<8x1xf32>,
    } else {
    }
    %c0 = arith.constant 0 : index
    %c0_1 = arith.constant 0 : index
    %3 = vector.load %arg2[%c0, %c0_1] : memref<8x512xf32, #tpu.memory_space<vmem>>, vector<8x512xf32>
    %c0_2 = arith.constant 0 : index
    %c0_3 = arith.constant 0 : index
    %4 = vector.load %arg3[%c0_2, %c0_3] : memref<8x1xf32, #tpu.memory_space<vmem>>, vector<8x1xf32>
    %cst = arith.constant dense<0xFF800000> : vector<8xf32>
    %5 = vector.multi_reduction <maximumf>, %3, %cst [1] : vector<8x512xf32> to vector<8xf32>
    %6 = vector.shape_cast %5 : vector<8xf32> to vector<8x1xf32>
    %7 = arith.maximumf %4, %6 : vector<8x1xf32>
    %c0_4 = arith.constant 0 : index
    %c0_5 = arith.constant 0 : index
    %8 = vector.load %arg4[%c0_4, %c0_5] : memref<8x1xf32, #tpu.memory_space<vmem>>, vector<8x1xf32>
    %9 = arith.subf %4, %7 : vector<8x1xf32>
    %10 = math.exp %9 : vector<8x1xf32>
    %11 = arith.mulf %8, %10 : vector<8x1xf32>
    %12 = vector.broadcast %7 : vector<8x1xf32> to vector<8x512xf32>
    %13 = arith.subf %3, %12 : vector<8x512xf32>
    %14 = math.exp %13 : vector<8x512xf32>
    %cst_6 = arith.constant dense<0.000000e+00> : vector<8xf32>
    %15 = vector.multi_reduction <add>, %14, %cst_6 [1] : vector<8x512xf32> to vector<8xf32>
    %16 = vector.shape_cast %15 : vector<8xf32> to vector<8x1xf32>
    %17 = arith.addf %11, %16 : vector<8x1xf32>
    %c0_7 = arith.constant 0 : index
    %c0_8 = arith.constant 0 : index
    %18 = vector.load %arg4[%c0_7, %c0_8] : memref<8x1xf32, #tpu.memory_space<vmem>>, vector<8x1xf32>
    tpu.vector_store %arg4[%c0_7, %c0_8], %17 {strides = array<i32>} : memref<8x1xf32, #tpu.memory_space<vmem>>, vector<8x1xf32>,
    %c0_9 = arith.constant 0 : index
    %c0_10 = arith.constant 0 : index
    %19 = vector.load %arg3[%c0_9, %c0_10] : memref<8x1xf32, #tpu.memory_space<vmem>>, vector<8x1xf32>
    tpu.vector_store %arg3[%c0_9, %c0_10], %7 {strides = array<i32>} : memref<8x1xf32, #tpu.memory_space<vmem>>, vector<8x1xf32>,
    return
  }
  func.func @transform_0(%arg0: i32, %arg1: i32) -> (i32, i32) {
    %c0_i32 = arith.constant 0 : i32
    return %arg0, %arg1 : i32, i32
  }
  func.func @transform_1(%arg0: i32, %arg1: i32) -> (i32, i32) {
    %c0_i32 = arith.constant 0 : i32
    %c0_i32_0 = arith.constant 0 : i32
    return %arg0, %c0_i32 : i32, i32
  }
  func.func @transform_2(%arg0: i32, %arg1: i32) -> (i32, i32) {
    %c0_i32 = arith.constant 0 : i32
    %c0_i32_0 = arith.constant 0 : i32
    return %arg0, %c0_i32 : i32, i32
  }
}

</mosaic_0001>

<llo_original>
// kernel: ne.0
$region0: #{ne.0}
  #allocation0 [shape = 's32[1]{0}', space=sflag, size = 0x4, scoped, tag = 'scoped memory for ne.0']
  %s0 = inlined_call_operand.<no memory space> [shape: s32[], index: 0, kind: input, shape index: {}]
  %s1 = inlined_call_operand.vmem [shape: s32[16], index: 1, kind: output, shape index: {}]
  %v2 = vstv %s0
  %3 = vst [vmem:[%s1] sm:$0x1] %v2

// kernel: pointer_pegasus_forward.3
$region0: #{pointer_pegasus_forward.3}
  #allocation0 [shape = 'u32[]', space=smem, size = 0x4, offset = 0x4, fixed_abs, tag = 'smem constant byte address 0x4 - core index']
  #allocation1 [shape = 'u32[72,128]{1,0:T(1,128)}', space=vmem, size = 0x9000, scoped, tag = 'internal scratch']
  #allocation2 [shape = 'f32[1,1]{1,0:T(1,128)S(1)}', space=vmem, size = 0x200, scoped, tag = 'scoped memory for pointer_pegasus_forward.3']
  %s0 = inlined_call_operand.vmem [shape: f32[4,16,16], index: 0, kind: input, shape index: {}]
  %s1 = inlined_call_operand.vmem [shape: f32[1,16], index: 1, kind: input, shape index: {}]
  %s2 = inlined_call_operand.vmem [shape: f32[16,32], index: 2, kind: input, shape index: {}]
  %s3 = inlined_call_operand.vmem [shape: f32[16,32], index: 3, kind: input, shape index: {}]
  %s4 = inlined_call_operand.vmem [shape: f32[1,32], index: 4, kind: input, shape index: {}]
  %s5 = inlined_call_operand.vmem [shape: f32[1,32], index: 5, kind: input, shape index: {}]
  %s6 = inlined_call_operand.<no memory space> [shape: f32[1,1], index: 6, kind: input, shape index: {}]
  %s7 = inlined_call_operand.vmem [shape: f32[16,16], index: 7, kind: output, shape index: {0}]
  %s8 = inlined_call_operand.vmem [shape: f32[16,1], index: 8, kind: output, shape index: {1}]
  %9 = xla_tuple %s7, %s8
  %s10 = sld [smem:[#allocation0]]
  $region107: #{pointer_pegasus_forward.3} parent=0
    _
  %s12 = ssub.s32 1, %s10
  %s13 = scalar_select 0, %s12, %s10
  %v14 = vstv %s6
  %15 = vst [vmem:[#allocation2] sm:$0x1] %v14
  $region1: #{pointer_pegasus_forward.3} parent=0
    #allocation3 [shape = 'u8[32768]{0}', space=vmem, size = 0x8000, scoped, tag = 'input window, operand 0']
    loop: start=0, step=1, limit=4
    $region2: #{pointer_pegasus_forward.3} parent=1 // loop_pre_header
      _
    $region3: #{pointer_pegasus_forward.3} parent=1 // loop_header
      %s17 = sphi 0, %s21
      %p18 = scmp.ge.s32.totalorder %s17, 4
      %s27 = sphi 0, %s29
      %s30 = sphi 0, %s27
      %s31 = sphi 0, %s30
      %s47 = sphi 0, %s31
      %s51 = sphi 0, %s51
      %s53 = sphi 0, %s51
      %s54 = sphi 0, %s53
      %s68 = sphi 0, %s54
      %s74 = sphi 0, %s76
      %s77 = sphi 0, %s74
      %s78 = sphi 0, %s77
      %s94 = sphi 0, %s78
      %s100 = sphi 0, %s102
      %s103 = sphi 0, %s100
      %s104 = sphi 0, %s103
      %s120 = sphi 0, %s104
      %s124 = sphi 0, %s124
      %s126 = sphi 0, %s124
      %s127 = sphi 0, %s126
      %s141 = sphi 0, %s127
      %s145 = sphi 0, %s145
      %s147 = sphi 0, %s145
      %s148 = sphi 0, %s147
      %s162 = sphi 0, %s148
      %s166 = sphi 0, %s166
      %s168 = sphi 0, %s166
      %s169 = sphi 0, %s168
      %s183 = sphi 0, %s169
      %s189 = sphi 0, %s191
      %s192 = sphi 0, %s189
      %s193 = sphi 0, %s192
      %s209 = sphi 0, %s193
      %s215 = sphi 0, %s217
      %s218 = sphi 0, %s215
      %s219 = sphi 0, %s218
      %s235 = sphi 0, %s219
    $region4: #{pointer_pegasus_forward.3} parent=1 // loop_header_branch
      %20 = sbr.rel (%p18) target = $region8
    $region5: #{pointer_pegasus_forward.3} parent=1 // loop_body
      %s22 = ssub.s32 %s17, 1
      %s23 = ssub.s32 %s17, 2
      %s24 = sadd.s32 %s17, 1
      %s25 = ssub.s32 %s17, %s24
      %p26 = scmp.eq.s32.totalorder %s25, 0
      %s28 = sadd.s32 %s27, 1
      %s29 = scalar_select %p26, %s27, %s28
      %p32 = pneg %p26
      %p33 = scmp.eq.s32.totalorder %s17, 1
      %p34 = por %p32, %p33
      %p35 = scmp.ne.s32.totalorder %s27, %s30
      %p36 = scmp.eq.s32.totalorder %s17, 0
      %p37 = por %p35, %p36
      %p38 = scmp.ne.s32.totalorder %s27, %s30
      %p39 = scmp.eq.s32.totalorder %s22, 1
      %p40 = por %p38, %p39
      %p41 = scmp.ne.s32.totalorder %s30, %s31
      %p42 = scmp.eq.s32.totalorder %s22, 0
      %p43 = por %p41, %p42
      %p44 = scmp.ne.s32.totalorder %s30, %s31
      %p45 = scmp.eq.s32.totalorder %s23, 1
      %p46 = por %p44, %p45
      %p48 = scmp.ne.s32.totalorder %s31, %s47
      %p49 = scmp.eq.s32.totalorder %s23, 0
      %p50 = por %p48, %p49
      %s52 = sadd.s32 %s51, 1
      %p55 = scmp.eq.s32.totalorder %s17, 1
      %p56 = scmp.ne.s32.totalorder %s51, %s53
      %p57 = scmp.eq.s32.totalorder %s17, 0
      %p58 = por %p56, %p57
      %p59 = scmp.ne.s32.totalorder %s51, %s53
      %p60 = scmp.eq.s32.totalorder %s22, 1
      %p61 = por %p59, %p60
      %p62 = scmp.ne.s32.totalorder %s53, %s54
      %p63 = scmp.eq.s32.totalorder %s22, 0
      %p64 = por %p62, %p63
      %p65 = scmp.ne.s32.totalorder %s53, %s54
      %p66 = scmp.eq.s32.totalorder %s23, 1
      %p67 = por %p65, %p66
      %p69 = scmp.ne.s32.totalorder %s54, %s68
      %p70 = scmp.eq.s32.totalorder %s23, 0
      %p71 = por %p69, %p70
      %s72 = ssub.s32 %s17, %s24
      %p73 = scmp.eq.s32.totalorder %s72, 0
      %s75 = sadd.s32 %s74, 1
      %s76 = scalar_select %p73, %s74, %s75
      %p79 = pneg %p73
      %p80 = scmp.eq.s32.totalorder %s17, 1
      %p81 = por %p79, %p80
      %p82 = scmp.ne.s32.totalorder %s74, %s77
      %p83 = scmp.eq.s32.totalorder %s17, 0
      %p84 = por %p82, %p83
      %p85 = scmp.ne.s32.totalorder %s74, %s77
      %p86 = scmp.eq.s32.totalorder %s22, 1
      %p87 = por %p85, %p86
      %p88 = scmp.ne.s32.totalorder %s77, %s78
      %p89 = scmp.eq.s32.totalorder %s22, 0
      %p90 = por %p88, %p89
      %p91 = scmp.ne.s32.totalorder %s77, %s78
      %p92 = scmp.eq.s32.totalorder %s23, 1
      %p93 = por %p91, %p92
      %p95 = scmp.ne.s32.totalorder %s78, %s94
      %p96 = scmp.eq.s32.totalorder %s23, 0
      %p97 = por %p95, %p96
      %s98 = ssub.s32 %s17, %s24
      %p99 = scmp.eq.s32.totalorder %s98, 0
      %s101 = sadd.s32 %s100, 1
      %s102 = scalar_select %p99, %s100, %s101
      %p105 = pneg %p99
      %p106 = scmp.eq.s32.totalorder %s17, 1
      %p107 = por %p105, %p106
      %p108 = scmp.ne.s32.totalorder %s100, %s103
      %p109 = scmp.eq.s32.totalorder %s17, 0
      %p110 = por %p108, %p109
      %p111 = scmp.ne.s32.totalorder %s100, %s103
      %p112 = scmp.eq.s32.totalorder %s22, 1
      %p113 = por %p111, %p112
      %p114 = scmp.ne.s32.totalorder %s103, %s104
      %p115 = scmp.eq.s32.totalorder %s22, 0
      %p116 = por %p114, %p115
      %p117 = scmp.ne.s32.totalorder %s103, %s104
      %p118 = scmp.eq.s32.totalorder %s23, 1
      %p119 = por %p117, %p118
      %p121 = scmp.ne.s32.totalorder %s104, %s120
      %p122 = scmp.eq.s32.totalorder %s23, 0
      %p123 = por %p121, %p122
      %s125 = sadd.s32 %s124, 1
      %p128 = scmp.eq.s32.totalorder %s17, 1
      %p129 = scmp.ne.s32.totalorder %s124, %s126
      %p130 = scmp.eq.s32.totalorder %s17, 0
      %p131 = por %p129, %p130
      %p132 = scmp.ne.s32.totalorder %s124, %s126
      %p133 = scmp.eq.s32.totalorder %s22, 1
      %p134 = por %p132, %p133
      %p135 = scmp.ne.s32.totalorder %s126, %s127
      %p136 = scmp.eq.s32.totalorder %s22, 0
      %p137 = por %p135, %p136
      %p138 = scmp.ne.s32.totalorder %s126, %s127
      %p139 = scmp.eq.s32.totalorder %s23, 1
      %p140 = por %p138, %p139
      %p142 = scmp.ne.s32.totalorder %s127, %s141
      %p143 = scmp.eq.s32.totalorder %s23, 0
      %p144 = por %p142, %p143
      %s146 = sadd.s32 %s145, 1
      %p149 = scmp.eq.s32.totalorder %s17, 1
      %p150 = scmp.ne.s32.totalorder %s145, %s147
      %p151 = scmp.eq.s32.totalorder %s17, 0
      %p152 = por %p150, %p151
      %p153 = scmp.ne.s32.totalorder %s145, %s147
      %p154 = scmp.eq.s32.totalorder %s22, 1
      %p155 = por %p153, %p154
      %p156 = scmp.ne.s32.totalorder %s147, %s148
      %p157 = scmp.eq.s32.totalorder %s22, 0
      %p158 = por %p156, %p157
      %p159 = scmp.ne.s32.totalorder %s147, %s148
      %p160 = scmp.eq.s32.totalorder %s23, 1
      %p161 = por %p159, %p160
      %p163 = scmp.ne.s32.totalorder %s148, %s162
      %p164 = scmp.eq.s32.totalorder %s23, 0
      %p165 = por %p163, %p164
      %s167 = sadd.s32 %s166, 1
      %p170 = scmp.eq.s32.totalorder %s17, 1
      %p171 = scmp.ne.s32.totalorder %s166, %s168
      %p172 = scmp.eq.s32.totalorder %s17, 0
      %p173 = por %p171, %p172
      %p174 = scmp.ne.s32.totalorder %s166, %s168
      %p175 = scmp.eq.s32.totalorder %s22, 1
      %p176 = por %p174, %p175
      %p177 = scmp.ne.s32.totalorder %s168, %s169
      %p178 = scmp.eq.s32.totalorder %s22, 0
      %p179 = por %p177, %p178
      %p180 = scmp.ne.s32.totalorder %s168, %s169
      %p181 = scmp.eq.s32.totalorder %s23, 1
      %p182 = por %p180, %p181
      %p184 = scmp.ne.s32.totalorder %s169, %s183
      %p185 = scmp.eq.s32.totalorder %s23, 0
      %p186 = por %p184, %p185
      %s187 = ssub.s32 %s17, %s24
      %p188 = scmp.eq.s32.totalorder %s187, 0
      %s190 = sadd.s32 %s189, 1
      %s191 = scalar_select %p188, %s189, %s190
      %p194 = pneg %p188
      %p195 = scmp.eq.s32.totalorder %s17, 1
      %p196 = por %p194, %p195
      %p197 = scmp.ne.s32.totalorder %s189, %s192
      %p198 = scmp.eq.s32.totalorder %s17, 0
      %p199 = por %p197, %p198
      %p200 = scmp.ne.s32.totalorder %s189, %s192
      %p201 = scmp.eq.s32.totalorder %s22, 1
      %p202 = por %p200, %p201
      %p203 = scmp.ne.s32.totalorder %s192, %s193
      %p204 = scmp.eq.s32.totalorder %s22, 0
      %p205 = por %p203, %p204
      %p206 = scmp.ne.s32.totalorder %s192, %s193
      %p207 = scmp.eq.s32.totalorder %s23, 1
      %p208 = por %p206, %p207
      %p210 = scmp.ne.s32.totalorder %s193, %s209
      %p211 = scmp.eq.s32.totalorder %s23, 0
      %p212 = por %p210, %p211
      %s213 = ssub.s32 %s17, %s24
      %p214 = scmp.eq.s32.totalorder %s213, 0
      %s216 = sadd.s32 %s215, 1
      %s217 = scalar_select %p214, %s215, %s216
      %p220 = pneg %p214
      %p221 = scmp.eq.s32.totalorder %s17, 1
      %p222 = por %p220, %p221
      %p223 = scmp.ne.s32.totalorder %s215, %s218
      %p224 = scmp.eq.s32.totalorder %s17, 0
      %p225 = por %p223, %p224
      %p226 = scmp.ne.s32.totalorder %s215, %s218
      %p227 = scmp.eq.s32.totalorder %s22, 1
      %p228 = por %p226, %p227
      %p229 = scmp.ne.s32.totalorder %s218, %s219
      %p230 = scmp.eq.s32.totalorder %s22, 0
      %p231 = por %p229, %p230
      %p232 = scmp.ne.s32.totalorder %s218, %s219
      %p233 = scmp.eq.s32.totalorder %s23, 1
      %p234 = por %p232, %p233
      %p236 = scmp.ne.s32.totalorder %s219, %s235
      %p237 = scmp.eq.s32.totalorder %s23, 0
      %p238 = por %p236, %p237
      %p239 = scmp.le.s32.totalorder 1, %s17
      %p240 = scmp.lt.s32.totalorder %s17, 3
      %p241 = pnand %p239, %p240
      %p242 = pneg %p241
      // Predicated region
      $region9: #{pointer_pegasus_forward.3} parent=5 // pred_check
        _
      $region10: #{pointer_pegasus_forward.3} parent=5 // pred_check_branch
        %244 = sbr.rel (%p241) target = $region12
      $region11: #{pointer_pegasus_forward.3} parent=5 // pred_region
        %s245 = ssub.s32 %s17, 1
        // Predicated region
        $region13: #{pointer_pegasus_forward.3} parent=11 // pred_check
          %p246 = pneg %p64
        $region14: #{pointer_pegasus_forward.3} parent=11 // pred_check_branch
          %248 = sbr.rel (%p246) target = $region16
        $region15: #{pointer_pegasus_forward.3} parent=11 // pred_region
          _
        $region16: #{pointer_pegasus_forward.3} parent=11 // pred_fallthru
          _
        // Predicated region
        $region17: #{pointer_pegasus_forward.3} parent=11 // pred_check
          %p249 = pneg %p137
        $region18: #{pointer_pegasus_forward.3} parent=11 // pred_check_branch
          %251 = sbr.rel (%p249) target = $region20
        $region19: #{pointer_pegasus_forward.3} parent=11 // pred_region
          _
        $region20: #{pointer_pegasus_forward.3} parent=11 // pred_fallthru
          _
        // Predicated region
        $region21: #{pointer_pegasus_forward.3} parent=11 // pred_check
          %p252 = pneg %p158
        $region22: #{pointer_pegasus_forward.3} parent=11 // pred_check_branch
          %254 = sbr.rel (%p252) target = $region24
        $region23: #{pointer_pegasus_forward.3} parent=11 // pred_region
          _
        $region24: #{pointer_pegasus_forward.3} parent=11 // pred_fallthru
          _
        // Predicated region
        $region25: #{pointer_pegasus_forward.3} parent=11 // pred_check
          %p255 = pneg %p179
        $region26: #{pointer_pegasus_forward.3} parent=11 // pred_check_branch
          %257 = sbr.rel (%p255) target = $region28
        $region27: #{pointer_pegasus_forward.3} parent=11 // pred_region
          _
        $region28: #{pointer_pegasus_forward.3} parent=11 // pred_fallthru
          _
      $region12: #{pointer_pegasus_forward.3} parent=5 // pred_fallthru
        _
      %p258 = scmp.lt.s32.totalorder %s17, 2
      // Predicated region
      $region29: #{pointer_pegasus_forward.3} parent=5 // pred_check
        %p259 = pneg %p258
      $region30: #{pointer_pegasus_forward.3} parent=5 // pred_check_branch
        %261 = sbr.rel (%p259) target = $region32
      $region31: #{pointer_pegasus_forward.3} parent=5 // pred_region
        // Predicated region
        $region33: #{pointer_pegasus_forward.3} parent=31 // pred_check
          %p262 = pneg %p37
        $region34: #{pointer_pegasus_forward.3} parent=31 // pred_check_branch
          %264 = sbr.rel (%p262) target = $region36
        $region35: #{pointer_pegasus_forward.3} parent=31 // pred_region
          %s265 = sand.u32 %s27, 1
          %s266 = sand.u32 %s27, 1
          %s267 = smul.addr %s266, 32
          %s268 = scalar_lea.vmem [#allocation3], %s267
          %s269 = smul.addr %s17, 8
          %s270 = scalar_lea.vmem %s0, %s269
          // Predicated region
          $region37: #{pointer_pegasus_forward.3} parent=35 // pred_check
            _
          $region38: #{pointer_pegasus_forward.3} parent=35 // pred_check_branch
            %272 = sbr.rel (0) target = $region40
          $region39: #{pointer_pegasus_forward.3} parent=35 // pred_region
            // Predicated region
            $region41: #{pointer_pegasus_forward.3} parent=39 // pred_check
              _
            $region42: #{pointer_pegasus_forward.3} parent=39 // pred_check_branch
              %274 = sbr.rel (0) target = $region44
            $region43: #{pointer_pegasus_forward.3} parent=39 // pred_region
              // Predicated region
              $region56: #{pointer_pegasus_forward.3} parent=43 // pred_check
                _
              $region57: #{pointer_pegasus_forward.3} parent=43 // pred_check_branch
                %296 = sbr.rel (0) target = $region59
              $region58: #{pointer_pegasus_forward.3} parent=43 // pred_region
                loop: start=0, step=1, limit=1
                $region60: #{pointer_pegasus_forward.3} parent=58 // loop_pre_header
                  _
                $region61: #{pointer_pegasus_forward.3} parent=58 // loop_header
                  %s298 = sphi 0, %s302
                  %p299 = scmp.ge.s32.totalorder %s298, 1
                  %s303 = sphi %s270, %s270
                  %s304 = sphi %s268, %s268
                $region62: #{pointer_pegasus_forward.3} parent=58 // loop_header_branch
                  %301 = sbr.rel (%p299) target = $region66
                $region63: #{pointer_pegasus_forward.3} parent=58 // loop_body
                  %v305 = vld [vmem:[%s303] sm:$0xff]
                  %306 = vst [vmem:[%s304] sm:$0xff] %v305
                  %v307 = vld [vmem:[%s303 + $0x10] sm:$0xff]
                  %308 = vst [vmem:[%s304 + $0x8] sm:$0xff] %v307
                  %v309 = vld [vmem:[%s303 + $0x20] sm:$0xff]
                  %310 = vst [vmem:[%s304 + $0x10] sm:$0xff] %v309
                  %v311 = vld [vmem:[%s303 + $0x30] sm:$0xff]
                  %312 = vst [vmem:[%s304 + $0x18] sm:$0xff] %v311
                $region64: #{pointer_pegasus_forward.3} parent=58 // loop_footer
                  %s302 = sadd.s32 1, %s298
                $region65: #{pointer_pegasus_forward.3} parent=58 // loop_footer_branch
                  %297 = sbr.rel target = $region61
                $region66: #{pointer_pegasus_forward.3} parent=58 // loop_exit
                  _
              $region59: #{pointer_pegasus_forward.3} parent=43 // pred_fallthru
                _
              // Predicated region
              $region67: #{pointer_pegasus_forward.3} parent=43 // pred_check
                _
              $region68: #{pointer_pegasus_forward.3} parent=43 // pred_check_branch
                %314 = sbr.rel target = $region70
              $region69: #{pointer_pegasus_forward.3} parent=43 // pred_region
                _
              $region70: #{pointer_pegasus_forward.3} parent=43 // pred_fallthru
                _
            $region44: #{pointer_pegasus_forward.3} parent=39 // pred_fallthru
              _
            // Predicated region
            $region45: #{pointer_pegasus_forward.3} parent=39 // pred_check
              _
            $region46: #{pointer_pegasus_forward.3} parent=39 // pred_check_branch
              %276 = sbr.rel target = $region48
            $region47: #{pointer_pegasus_forward.3} parent=39 // pred_region
              %s278 = ssub.s32 256, 1
              loop: start=0, step=1, limit=1
              $region49: #{pointer_pegasus_forward.3} parent=47 // loop_pre_header
                _
              $region50: #{pointer_pegasus_forward.3} parent=47 // loop_header
                %s280 = sphi 0, %s284
                %p281 = scmp.ge.s32.totalorder %s280, 1
                %s285 = sphi %s270, %s270
                %s286 = sphi %s268, %s268
              $region51: #{pointer_pegasus_forward.3} parent=47 // loop_header_branch
                %283 = sbr.rel (%p281) target = $region55
              $region52: #{pointer_pegasus_forward.3} parent=47 // loop_body
                %v287 = vld [vmem:[%s285] sm:%s278]
                %288 = vst [vmem:[%s286] sm:%s278] %v287
                %v289 = vld [vmem:[%s285 + $0x10] sm:%s278]
                %290 = vst [vmem:[%s286 + $0x8] sm:%s278] %v289
                %v291 = vld [vmem:[%s285 + $0x20] sm:%s278]
                %292 = vst [vmem:[%s286 + $0x10] sm:%s278] %v291
                %v293 = vld [vmem:[%s285 + $0x30] sm:%s278]
                %294 = vst [vmem:[%s286 + $0x18] sm:%s278] %v293
              $region53: #{pointer_pegasus_forward.3} parent=47 // loop_footer
                %s284 = sadd.s32 1, %s280
              $region54: #{pointer_pegasus_forward.3} parent=47 // loop_footer_branch
                %279 = sbr.rel target = $region50
              $region55: #{pointer_pegasus_forward.3} parent=47 // loop_exit
                _
            $region48: #{pointer_pegasus_forward.3} parent=39 // pred_fallthru
              _
          $region40: #{pointer_pegasus_forward.3} parent=35 // pred_fallthru
            _
          %315 = vnop
        $region36: #{pointer_pegasus_forward.3} parent=31 // pred_fallthru
          _
        // Predicated region
        $region71: #{pointer_pegasus_forward.3} parent=31 // pred_check
          %p316 = pneg %p84
        $region72: #{pointer_pegasus_forward.3} parent=31 // pred_check_branch
          %318 = sbr.rel (%p316) target = $region74
        $region73: #{pointer_pegasus_forward.3} parent=31 // pred_region
          %p319 = scmp.lt.s32.totalorder %s17, 1
          %s320 = scalar_select %p319, %s17, 1
          %s321 = smul.addr %s320, 8
          %s322 = scalar_lea.vmem %s2, %s321
        $region74: #{pointer_pegasus_forward.3} parent=31 // pred_fallthru
          _
        // Predicated region
        $region75: #{pointer_pegasus_forward.3} parent=31 // pred_check
          %p323 = pneg %p110
        $region76: #{pointer_pegasus_forward.3} parent=31 // pred_check_branch
          %325 = sbr.rel (%p323) target = $region78
        $region77: #{pointer_pegasus_forward.3} parent=31 // pred_region
          %p326 = scmp.lt.s32.totalorder %s17, 1
          %s327 = scalar_select %p326, %s17, 1
          %s328 = smul.addr %s327, 8
          %s329 = scalar_lea.vmem %s3, %s328
        $region78: #{pointer_pegasus_forward.3} parent=31 // pred_fallthru
          _
      $region32: #{pointer_pegasus_forward.3} parent=5 // pred_fallthru
        _
      %p330 = scmp.le.s32.totalorder 1, %s17
      %p331 = scmp.lt.s32.totalorder %s17, 3
      %p332 = pnand %p330, %p331
      %p333 = pneg %p332
      // Predicated region
      $region79: #{pointer_pegasus_forward.3} parent=5 // pred_check
        _
      $region80: #{pointer_pegasus_forward.3} parent=5 // pred_check_branch
        %335 = sbr.rel (%p332) target = $region82
      $region81: #{pointer_pegasus_forward.3} parent=5 // pred_region
        %s336 = ssub.s32 %s17, 1
        %s337 = sand.u32 %s30, 1
        %s338 = sand.u32 %s30, 1
        %s339 = smul.addr %s338, 32
        %s340 = scalar_lea.vmem [#allocation3], %s339
        // Predicated region
        $region83: #{pointer_pegasus_forward.3} parent=81 // pred_check
          %p341 = pneg %p43
        $region84: #{pointer_pegasus_forward.3} parent=81 // pred_check_branch
          %343 = sbr.rel (%p341) target = $region86
        $region85: #{pointer_pegasus_forward.3} parent=81 // pred_region
          _
        $region86: #{pointer_pegasus_forward.3} parent=81 // pred_fallthru
          _
        %s344 = sand.u32 %s30, 1
        %s345 = sand.u32 %s30, 1
        %s346 = smul.addr %s345, 32
        %s347 = scalar_lea.vmem [#allocation3], %s346
        %p348 = pneg %p43
        %p349 = pneg %p40
        %p350 = pneg %p64
        %p351 = pneg %p61
        %p352 = scmp.lt.s32.totalorder %s22, 1
        %s353 = scalar_select %p352, %s22, 1
        %s354 = smul.addr %s353, 8
        %s355 = scalar_lea.vmem %s2, %s354
        %p356 = pneg %p90
        %p357 = pneg %p87
        %p358 = scmp.lt.s32.totalorder %s22, 1
        %s359 = scalar_select %p358, %s22, 1
        %s360 = smul.addr %s359, 8
        %s361 = scalar_lea.vmem %s3, %s360
        %p362 = pneg %p116
        %p363 = pneg %p113
        %p364 = pneg %p137
        %p365 = pneg %p134
        %p366 = pneg %p158
        %p367 = pneg %p155
        %p368 = pneg %p179
        %p369 = pneg %p176
        %p370 = pneg %p205
        %p371 = pneg %p202
        %p372 = scmp.lt.s32.totalorder %s22, 1
        %s373 = scalar_select %p372, %s22, 1
        %s374 = smul.addr %s373, 8
        %s375 = scalar_lea.vmem %s7, %s374
        %p376 = pneg %p231
        %p377 = pneg %p228
        %p378 = scmp.lt.s32.totalorder %s22, 1
        %s379 = scalar_select %p378, %s22, 1
        %s380 = smul.addr %s379, 8
        %s381 = scalar_lea.vmem %s8, %s380
        %p382 = scmp.lt.s32.totalorder %s22, 1
        %s383 = scalar_select %p382, %s22, 1
        %s384 = smul.addr %s383, 8
        %s385 = scalar_lea.vmem %s2, %s384
        %p386 = scmp.lt.s32.totalorder %s22, 1
        %s387 = scalar_select %p386, %s22, 1
        %s388 = smul.addr %s387, 8
        %s389 = scalar_lea.vmem %s3, %s388
        %p390 = scmp.lt.s32.totalorder %s22, 1
        %s391 = scalar_select %p390, %s22, 1
        %s392 = smul.addr %s391, 8
        %s393 = scalar_lea.vmem %s7, %s392
        %p394 = scmp.lt.s32.totalorder %s22, 1
        %s395 = scalar_select %p394, %s22, 1
        %s396 = smul.addr %s395, 8
        %s397 = scalar_lea.vmem %s8, %s396
        %v398 = vld [vmem:[%s340] sm:$0xff]
        %v399 = vld [vmem:[%s340 + $0x8] sm:$0xff]
        %v400 = vld [vmem:[%s340 + $0x10] sm:$0xff]
        %v401 = vld [vmem:[%s340 + $0x18] sm:$0xff]
        %vm402 = vcmask 130048
        %v403 = vsel %vm402, %v398, 0.0
        %v404 = vsel %vm402, %v399, 0.0
        %v405 = vadd.f32 %v403, %v404
        %v406 = vsel %vm402, %v400, 0.0
        %v407 = vadd.f32 %v405, %v406
        %v408 = vsel %vm402, %v401, 0.0
        %v409 = vadd.f32 %v407, %v408
        %v410 = vmul.f32 %v409, 0.0625
        %411 = vst.msk [vmem:[%s393] sm:$0xff] %vm402, %v410
        %v412 = vld [vmem:[%s1] sm:$0x1]
        %v414 = vperm.slane %v412, 0
        %v416 = vmul.f32 %v410, %v414
        %v417 = vsel %vm402, %v416, 0.0
        %418 = vadd.xlane.f32.xlu0 %v417
        %v419 = vpop.xlane.xlu0 %418
        %v420 = vld [vmem:[%s385] sm:$0xff]
        %v421 = vld [vmem:[%s4] sm:$0x1]
        %v423 = vperm.slane %v421, 0
        %v425 = vmul.f32 %v420, %v423
        %vm426 = vcmask 261120
        %v427 = vsel %vm426, %v425, 0.0
        %428 = vadd.xlane.f32.xlu0 %v427
        %v429 = vpop.xlane.xlu0 %428
        %v430 = vadd.f32 %v419, %v429
        %v431 = vld [vmem:[%s389] sm:$0xff]
        %v432 = vld [vmem:[%s5] sm:$0x1]
        %v434 = vperm.slane %v432, 0
        %v436 = vmul.f32 %v431, %v434
        %v437 = vsel %vm426, %v436, 0.0
        %438 = vadd.xlane.f32.xlu0 %v437
        %v439 = vpop.xlane.xlu0 %438
        %v440 = vadd.f32 %v430, %v439
        %v441 = vld [vmem:[#allocation2] sm:$0x1]
        %v443 = vperm.slane %v441, 0
        %v445 = vadd.f32 %v440, %v443
        %v446 = vxor.u32 %v445, 2147483648
        %v447 = vmul.f32 %v446, 1.442695
        %v448 = vpow.pop %v447
        %v449 = vadd.f32 %v448, 1.0
        %v450 = vrcp.pop %v449
        %v451 = vmul.f32 %v449, %v450
        %v452 = vsub.f32 1.0, %v451
        %v453 = vmul.f32 %v450, %v452
        %v454 = vadd.f32 %v450, %v453
        %vm455 = vweird.f32 %v449
        %vm456 = vweird.f32 %v450
        %vm457 = vmor %vm455, %vm456
        %v458 = vsel %vm457, %v450, %v454
        %v459 = vand.u32 2147483647, %v449
        %vm460 = vcmp.eq.f32.partialorder %v459, 8.507059e+37
        %v461 = vand.u32 %v449, 2147483648
        %v462 = vor.u32 1.1754944e-38, %v461
        %v463 = vsel %vm460, %v462, %v458
        %v464 = vmul.f32 1.0, %v463
        %vm465 = vcmask 7168
        %466 = vst.msk [vmem:[%s397] sm:$0xff] %vm465, %v464
        %p467 = scmp.lt.s32.totalorder %s22, 1
        %s468 = scalar_select %p467, %s22, 1
        %s469 = smul.addr %s468, 8
        %s470 = scalar_lea.vmem %s7, %s469
        %p471 = scmp.lt.s32.totalorder %s22, 1
        %s472 = scalar_select %p471, %s22, 1
        %s473 = smul.addr %s472, 8
        %s474 = scalar_lea.vmem %s8, %s473
        // Predicated region
        $region87: #{pointer_pegasus_forward.3} parent=81 // pred_check
          %p475 = pneg %p202
        $region88: #{pointer_pegasus_forward.3} parent=81 // pred_check_branch
          %477 = sbr.rel (%p475) target = $region90
        $region89: #{pointer_pegasus_forward.3} parent=81 // pred_region
          _
        $region90: #{pointer_pegasus_forward.3} parent=81 // pred_fallthru
          _
        // Predicated region
        $region91: #{pointer_pegasus_forward.3} parent=81 // pred_check
          %p478 = pneg %p228
        $region92: #{pointer_pegasus_forward.3} parent=81 // pred_check_branch
          %480 = sbr.rel (%p478) target = $region94
        $region93: #{pointer_pegasus_forward.3} parent=81 // pred_region
          _
        $region94: #{pointer_pegasus_forward.3} parent=81 // pred_fallthru
          _
      $region82: #{pointer_pegasus_forward.3} parent=5 // pred_fallthru
        _
      %p481 = scmp.le.s32.totalorder 2, %s17
      // Predicated region
      $region95: #{pointer_pegasus_forward.3} parent=5 // pred_check
        %p482 = pneg %p481
      $region96: #{pointer_pegasus_forward.3} parent=5 // pred_check_branch
        %484 = sbr.rel (%p482) target = $region98
      $region97: #{pointer_pegasus_forward.3} parent=5 // pred_region
        %s485 = ssub.s32 %s17, 2
        // Predicated region
        $region99: #{pointer_pegasus_forward.3} parent=97 // pred_check
          %p486 = pneg %p208
        $region100: #{pointer_pegasus_forward.3} parent=97 // pred_check_branch
          %488 = sbr.rel (%p486) target = $region102
        $region101: #{pointer_pegasus_forward.3} parent=97 // pred_region
          %p489 = scmp.lt.s32.totalorder %s23, 1
          %s490 = scalar_select %p489, %s23, 1
          %s491 = smul.addr %s490, 8
          %s492 = scalar_lea.vmem %s7, %s491
        $region102: #{pointer_pegasus_forward.3} parent=97 // pred_fallthru
          _
        // Predicated region
        $region103: #{pointer_pegasus_forward.3} parent=97 // pred_check
          %p493 = pneg %p234
        $region104: #{pointer_pegasus_forward.3} parent=97 // pred_check_branch
          %495 = sbr.rel (%p493) target = $region106
        $region105: #{pointer_pegasus_forward.3} parent=97 // pred_region
          %p496 = scmp.lt.s32.totalorder %s23, 1
          %s497 = scalar_select %p496, %s23, 1
          %s498 = smul.addr %s497, 8
          %s499 = scalar_lea.vmem %s8, %s498
        $region106: #{pointer_pegasus_forward.3} parent=97 // pred_fallthru
          _
      $region98: #{pointer_pegasus_forward.3} parent=5 // pred_fallthru
        _
    $region6: #{pointer_pegasus_forward.3} parent=1 // loop_footer
      %s21 = sadd.s32 1, %s17
    $region7: #{pointer_pegasus_forward.3} parent=1 // loop_footer_branch
      %16 = sbr.rel target = $region3
    $region8: #{pointer_pegasus_forward.3} parent=1 // loop_exit
      _

// kernel: pointer_pegasus_forward.4
$region0: #{pointer_pegasus_forward.4}
  #allocation0 [shape = 'u32[]', space=smem, size = 0x4, offset = 0x4, fixed_abs, tag = 'smem constant byte address 0x4 - core index']
  #allocation1 [shape = 'u32[72,128]{1,0:T(1,128)}', space=vmem, size = 0x9000, scoped, tag = 'internal scratch']
  %s0 = inlined_call_operand.vmem [shape: f32[16,2048], index: 0, kind: input, shape index: {}]
  %s1 = inlined_call_operand.vmem [shape: f32[16,1], index: 1, kind: output, shape index: {0}]
  %s2 = inlined_call_operand.vmem [shape: f32[16,1], index: 2, kind: output, shape index: {1}]
  %3 = xla_tuple %s1, %s2
  %s4 = sld [smem:[#allocation0]]
  $region49: #{pointer_pegasus_forward.4} parent=0
    _
  %s6 = ssub.s32 1, %s4
  %s7 = scalar_select 0, %s6, %s4
  loop: start=0, step=1, limit=10
  $region2: #{pointer_pegasus_forward.4} parent=0 // loop_pre_header
    _
  $region3: #{pointer_pegasus_forward.4} parent=0 // loop_header
    %s9 = sphi 0, %s13
    %p10 = scmp.ge.s32.totalorder %s9, 10
    %s16 = sphi 0, %s28
    %s17 = sphi 0, %s24
    %s18 = sphi 0, %s16
    %s19 = sphi 0, %s17
    %s20 = sphi 0, %s18
    %s21 = sphi 0, %s19
    %s33 = sphi 0, %s35
    %s36 = sphi 0, %s33
    %s37 = sphi 0, %s36
    %s53 = sphi 0, %s37
    %s59 = sphi 0, %s61
    %s62 = sphi 0, %s59
    %s63 = sphi 0, %s62
    %s79 = sphi 0, %s63
    %s85 = sphi 0, %s87
    %s88 = sphi 0, %s85
    %s89 = sphi 0, %s88
    %s105 = sphi 0, %s89
  $region4: #{pointer_pegasus_forward.4} parent=0 // loop_header_branch
    %12 = sbr.rel (%p10) target = $region8
  $region5: #{pointer_pegasus_forward.4} parent=0 // loop_body
    %s14 = ssub.s32 %s9, 1
    %s15 = ssub.s32 %s9, 2
    %s22 = sadd.s32 1, %s17
    %p23 = scmp.ge.s32.totalorder %s22, 4
    %s24 = scalar_select %p23, 0, %s22
    %s25 = sadd.s32 1, %s16
    %s26 = scalar_select %p23, %s25, %s16
    %p27 = scmp.ge.s32.totalorder %s26, 2
    %s28 = scalar_select %p27, 0, %s26
    %s29 = ssub.s32 %s16, %s28
    %s30 = ssub.s32 %s17, %s24
    %s31 = sor.u32 %s29, %s30
    %p32 = scmp.eq.s32.totalorder %s31, 0
    %s34 = sadd.s32 %s33, 1
    %s35 = scalar_select %p32, %s33, %s34
    %p38 = pneg %p32
    %p39 = scmp.eq.s32.totalorder %s9, 7
    %p40 = por %p38, %p39
    %p41 = scmp.ne.s32.totalorder %s33, %s36
    %p42 = scmp.eq.s32.totalorder %s9, 0
    %p43 = por %p41, %p42
    %p44 = scmp.ne.s32.totalorder %s33, %s36
    %p45 = scmp.eq.s32.totalorder %s14, 7
    %p46 = por %p44, %p45
    %p47 = scmp.ne.s32.totalorder %s36, %s37
    %p48 = scmp.eq.s32.totalorder %s14, 0
    %p49 = por %p47, %p48
    %p50 = scmp.ne.s32.totalorder %s36, %s37
    %p51 = scmp.eq.s32.totalorder %s15, 7
    %p52 = por %p50, %p51
    %p54 = scmp.ne.s32.totalorder %s37, %s53
    %p55 = scmp.eq.s32.totalorder %s15, 0
    %p56 = por %p54, %p55
    %s57 = ssub.s32 %s16, %s28
    %p58 = scmp.eq.s32.totalorder %s57, 0
    %s60 = sadd.s32 %s59, 1
    %s61 = scalar_select %p58, %s59, %s60
    %p64 = pneg %p58
    %p65 = scmp.eq.s32.totalorder %s9, 7
    %p66 = por %p64, %p65
    %p67 = scmp.ne.s32.totalorder %s59, %s62
    %p68 = scmp.eq.s32.totalorder %s9, 0
    %p69 = por %p67, %p68
    %p70 = scmp.ne.s32.totalorder %s59, %s62
    %p71 = scmp.eq.s32.totalorder %s14, 7
    %p72 = por %p70, %p71
    %p73 = scmp.ne.s32.totalorder %s62, %s63
    %p74 = scmp.eq.s32.totalorder %s14, 0
    %p75 = por %p73, %p74
    %p76 = scmp.ne.s32.totalorder %s62, %s63
    %p77 = scmp.eq.s32.totalorder %s15, 7
    %p78 = por %p76, %p77
    %p80 = scmp.ne.s32.totalorder %s63, %s79
    %p81 = scmp.eq.s32.totalorder %s15, 0
    %p82 = por %p80, %p81
    %s83 = ssub.s32 %s16, %s28
    %p84 = scmp.eq.s32.totalorder %s83, 0
    %s86 = sadd.s32 %s85, 1
    %s87 = scalar_select %p84, %s85, %s86
    %p90 = pneg %p84
    %p91 = scmp.eq.s32.totalorder %s9, 7
    %p92 = por %p90, %p91
    %p93 = scmp.ne.s32.totalorder %s85, %s88
    %p94 = scmp.eq.s32.totalorder %s9, 0
    %p95 = por %p93, %p94
    %p96 = scmp.ne.s32.totalorder %s85, %s88
    %p97 = scmp.eq.s32.totalorder %s14, 7
    %p98 = por %p96, %p97
    %p99 = scmp.ne.s32.totalorder %s88, %s89
    %p100 = scmp.eq.s32.totalorder %s14, 0
    %p101 = por %p99, %p100
    %p102 = scmp.ne.s32.totalorder %s88, %s89
    %p103 = scmp.eq.s32.totalorder %s15, 7
    %p104 = por %p102, %p103
    %p106 = scmp.ne.s32.totalorder %s89, %s105
    %p107 = scmp.eq.s32.totalorder %s15, 0
    %p108 = por %p106, %p107
    %p109 = scmp.le.s32.totalorder 1, %s9
    %p110 = scmp.lt.s32.totalorder %s9, 9
    %p111 = pnand %p109, %p110
    %p112 = pneg %p111
    // Predicated region
    $region9: #{pointer_pegasus_forward.4} parent=5 // pred_check
      _
    $region10: #{pointer_pegasus_forward.4} parent=5 // pred_check_branch
      %114 = sbr.rel (%p111) target = $region12
    $region11: #{pointer_pegasus_forward.4} parent=5 // pred_region
      %s115 = ssub.s32 %s9, 1
    $region12: #{pointer_pegasus_forward.4} parent=5 // pred_fallthru
      _
    %p116 = scmp.lt.s32.totalorder %s9, 8
    // Predicated region
    $region13: #{pointer_pegasus_forward.4} parent=5 // pred_check
      %p117 = pneg %p116
    $region14: #{pointer_pegasus_forward.4} parent=5 // pred_check_branch
      %119 = sbr.rel (%p117) target = $region16
    $region15: #{pointer_pegasus_forward.4} parent=5 // pred_region
      // Predicated region
      $region17: #{pointer_pegasus_forward.4} parent=15 // pred_check
        %p120 = pneg %p43
      $region18: #{pointer_pegasus_forward.4} parent=15 // pred_check_branch
        %122 = sbr.rel (%p120) target = $region20
      $region19: #{pointer_pegasus_forward.4} parent=15 // pred_region
        %s123 = smul.u32 4, %s17
        %p124 = scmp.lt.s32.totalorder %s16, 1
        %s125 = scalar_select %p124, %s16, 1
        %p126 = scmp.lt.s32.totalorder %s123, 15
        %s127 = scalar_select %p126, %s123, 15
        %s128 = smul.addr %s125, 16
        %s129 = sadd.s32 %s127, %s128
        %s130 = smul.addr %s129, 8
        %s131 = scalar_lea.vmem %s0, %s130
        %s132 = smul.u32 4, %s17
      $region20: #{pointer_pegasus_forward.4} parent=15 // pred_fallthru
        _
    $region16: #{pointer_pegasus_forward.4} parent=5 // pred_fallthru
      _
    %p133 = scmp.le.s32.totalorder 1, %s9
    %p134 = scmp.lt.s32.totalorder %s9, 9
    %p135 = pnand %p133, %p134
    %p136 = pneg %p135
    // Predicated region
    $region21: #{pointer_pegasus_forward.4} parent=5 // pred_check
      _
    $region22: #{pointer_pegasus_forward.4} parent=5 // pred_check_branch
      %138 = sbr.rel (%p135) target = $region24
    $region23: #{pointer_pegasus_forward.4} parent=5 // pred_region
      %s139 = ssub.s32 %s9, 1
      %s140 = smul.u32 4, %s19
      %p141 = scmp.lt.s32.totalorder %s18, 1
      %s142 = scalar_select %p141, %s18, 1
      %p143 = scmp.lt.s32.totalorder %s140, 15
      %s144 = scalar_select %p143, %s140, 15
      %s145 = smul.addr %s142, 16
      %s146 = sadd.s32 %s144, %s145
      %s147 = smul.addr %s146, 8
      %s148 = scalar_lea.vmem %s0, %s147
      %p149 = pneg %p49
      %p150 = pneg %p46
      %p151 = pneg %p75
      %p152 = pneg %p72
      %p153 = scmp.lt.s32.totalorder %s18, 1
      %s154 = scalar_select %p153, %s18, 1
      %s155 = smul.addr %s154, 8
      %s156 = scalar_lea.vmem %s1, %s155
      %p157 = pneg %p101
      %p158 = pneg %p98
      %p159 = scmp.lt.s32.totalorder %s18, 1
      %s160 = scalar_select %p159, %s18, 1
      %s161 = smul.addr %s160, 8
      %s162 = scalar_lea.vmem %s2, %s161
      %s163 = smul.u32 4, %s19
      %p164 = scmp.lt.s32.totalorder %s18, 1
      %s165 = scalar_select %p164, %s18, 1
      %p166 = scmp.lt.s32.totalorder %s163, 15
      %s167 = scalar_select %p166, %s163, 15
      %s168 = smul.addr %s165, 16
      %s169 = sadd.s32 %s167, %s168
      %s170 = smul.addr %s169, 8
      %s171 = scalar_lea.vmem %s0, %s170
      %s172 = smul.u32 4, %s19
      %p173 = scmp.lt.s32.totalorder %s18, 1
      %s174 = scalar_select %p173, %s18, 1
      %s175 = smul.addr %s174, 8
      %s176 = scalar_lea.vmem %s1, %s175
      %p177 = scmp.lt.s32.totalorder %s18, 1
      %s178 = scalar_select %p177, %s18, 1
      %s179 = smul.addr %s178, 8
      %s180 = scalar_lea.vmem %s2, %s179
      %p181 = scmp.eq.s32.totalorder %s19, 0
      // Predicated region
      $region25: #{pointer_pegasus_forward.4} parent=23 // pred_check
        %p182 = pneg %p181
      $region26: #{pointer_pegasus_forward.4} parent=23 // pred_check_branch
        %184 = sbr.rel (%p182) target = $region28
      $region27: #{pointer_pegasus_forward.4} parent=23 // pred_region
        %vm185 = vcmask 7168
        %186 = vst.msk [vmem:[%s176] sm:$0xff] %vm185, -inf
        %187 = vst.msk [vmem:[%s180] sm:$0xff] %vm185, 0.0
      $region28: #{pointer_pegasus_forward.4} parent=23 // pred_fallthru
        _
      %v188 = vld [vmem:[%s171] sm:$0xff]
      %v189 = vld [vmem:[%s171 + $0x8] sm:$0xff]
      %v190 = vld [vmem:[%s171 + $0x10] sm:$0xff]
      %v191 = vld [vmem:[%s171 + $0x18] sm:$0xff]
      %v192 = vld [vmem:[%s176] sm:$0xff]
      %v193 = vmax.f32 %v188, %v189
      %v194 = vmax.f32 %v190, %v191
      %v195 = vmax.f32 %v193, %v194
      %196 = vmax.xlane.f32.xlu0 %v195
      %v197 = vpop.xlane.xlu0 %196
      %v198 = vmax.f32 %v192, %v197
      %v199 = vld [vmem:[%s180] sm:$0xff]
      %v200 = vsub.f32 %v192, %v198
      %v201 = vmul.f32 %v200, 1.442695
      %v202 = vpow.pop %v201
      %v203 = vmul.f32 %v199, %v202
      %205 = vset.pattern.permute.xlu0 0
      %206 = vperm.xlu0 %205, %v198
      %v207 = vpop.permute.xlu0 %206
      %v209 = vsub.f32 %v188, %v207
      %v210 = vsub.f32 %v189, %v207
      %v211 = vsub.f32 %v190, %v207
      %v212 = vsub.f32 %v191, %v207
      %v213 = vmul.f32 %v209, 1.442695
      %v214 = vpow.pop %v213
      %v215 = vmul.f32 %v210, 1.442695
      %v216 = vpow.pop %v215
      %v217 = vmul.f32 %v211, 1.442695
      %v218 = vpow.pop %v217
      %v219 = vmul.f32 %v212, 1.442695
      %v220 = vpow.pop %v219
      %v221 = vadd.f32 %v214, %v216
      %v222 = vadd.f32 %v221, %v218
      %v223 = vadd.f32 %v222, %v220
      %224 = vadd.xlane.f32.xlu0 %v223
      %v225 = vpop.xlane.xlu0 %224
      %v226 = vadd.f32 %v203, %v225
      %vm227 = vcmask 7168
      %228 = vst.msk [vmem:[%s180] sm:$0xff] %vm227, %v226
      %229 = vst.msk [vmem:[%s176] sm:$0xff] %vm227, %v198
      %p230 = scmp.lt.s32.totalorder %s18, 1
      %s231 = scalar_select %p230, %s18, 1
      %s232 = smul.addr %s231, 8
      %s233 = scalar_lea.vmem %s1, %s232
      %p234 = scmp.lt.s32.totalorder %s18, 1
      %s235 = scalar_select %p234, %s18, 1
      %s236 = smul.addr %s235, 8
      %s237 = scalar_lea.vmem %s2, %s236
      // Predicated region
      $region29: #{pointer_pegasus_forward.4} parent=23 // pred_check
        %p238 = pneg %p72
      $region30: #{pointer_pegasus_forward.4} parent=23 // pred_check_branch
        %240 = sbr.rel (%p238) target = $region32
      $region31: #{pointer_pegasus_forward.4} parent=23 // pred_region
        _
      $region32: #{pointer_pegasus_forward.4} parent=23 // pred_fallthru
        _
      // Predicated region
      $region33: #{pointer_pegasus_forward.4} parent=23 // pred_check
        %p241 = pneg %p98
      $region34: #{pointer_pegasus_forward.4} parent=23 // pred_check_branch
        %243 = sbr.rel (%p241) target = $region36
      $region35: #{pointer_pegasus_forward.4} parent=23 // pred_region
        _
      $region36: #{pointer_pegasus_forward.4} parent=23 // pred_fallthru
        _
    $region24: #{pointer_pegasus_forward.4} parent=5 // pred_fallthru
      _
    %p244 = scmp.le.s32.totalorder 2, %s9
    // Predicated region
    $region37: #{pointer_pegasus_forward.4} parent=5 // pred_check
      %p245 = pneg %p244
    $region38: #{pointer_pegasus_forward.4} parent=5 // pred_check_branch
      %247 = sbr.rel (%p245) target = $region40
    $region39: #{pointer_pegasus_forward.4} parent=5 // pred_region
      %s248 = ssub.s32 %s9, 2
      // Predicated region
      $region41: #{pointer_pegasus_forward.4} parent=39 // pred_check
        %p249 = pneg %p78
      $region42: #{pointer_pegasus_forward.4} parent=39 // pred_check_branch
        %251 = sbr.rel (%p249) target = $region44
      $region43: #{pointer_pegasus_forward.4} parent=39 // pred_region
        %p252 = scmp.lt.s32.totalorder %s20, 1
        %s253 = scalar_select %p252, %s20, 1
        %s254 = smul.addr %s253, 8
        %s255 = scalar_lea.vmem %s1, %s254
      $region44: #{pointer_pegasus_forward.4} parent=39 // pred_fallthru
        _
      // Predicated region
      $region45: #{pointer_pegasus_forward.4} parent=39 // pred_check
        %p256 = pneg %p104
      $region46: #{pointer_pegasus_forward.4} parent=39 // pred_check_branch
        %258 = sbr.rel (%p256) target = $region48
      $region47: #{pointer_pegasus_forward.4} parent=39 // pred_region
        %p259 = scmp.lt.s32.totalorder %s20, 1
        %s260 = scalar_select %p259, %s20, 1
        %s261 = smul.addr %s260, 8
        %s262 = scalar_lea.vmem %s2, %s261
      $region48: #{pointer_pegasus_forward.4} parent=39 // pred_fallthru
        _
    $region40: #{pointer_pegasus_forward.4} parent=5 // pred_fallthru
      _
  $region6: #{pointer_pegasus_forward.4} parent=0 // loop_footer
    %s13 = sadd.s32 1, %s9
  $region7: #{pointer_pegasus_forward.4} parent=0 // loop_footer_branch
    %8 = sbr.rel target = $region3
  $region8: #{pointer_pegasus_forward.4} parent=0 // loop_exit
    _

// kernel: pointer_pegasus_forward.5
$region0: #{pointer_pegasus_forward.5}
  #allocation0 [shape = 'u32[]', space=smem, size = 0x4, offset = 0x4, fixed_abs, tag = 'smem constant byte address 0x4 - core index']
  #allocation1 [shape = 'u32[72,128]{1,0:T(1,128)}', space=vmem, size = 0x9000, scoped, tag = 'internal scratch']
  #allocation2 [shape = 's32[1]{0}', space=sflag, size = 0x4, scoped, tag = 'scoped memory for pointer_pegasus_forward.5']
  #allocation3 [shape = 'u8[512]{0}', space=smem, size = 0x200, scoped, tag = 'prefetched SMEM operand 0']
  %s0 = inlined_call_operand.vmem [shape: s32[8], index: 0, kind: input, shape index: {}]
  %s1 = inlined_call_operand.vmem [shape: s32[16,1], index: 1, kind: input, shape index: {}]
  %s2 = inlined_call_operand.vmem [shape: f32[16,16], index: 2, kind: input, shape index: {}]
  %s3 = inlined_call_operand.vmem [shape: f32[16,1], index: 3, kind: input, shape index: {}]
  %s4 = inlined_call_operand.vmem [shape: f32[16,1], index: 4, kind: input, shape index: {}]
  %s5 = inlined_call_operand.vmem [shape: f32[16,1], index: 5, kind: input, shape index: {}]
  %s6 = inlined_call_operand.vmem [shape: f32[16,2048], index: 6, kind: input, shape index: {}]
  %s7 = inlined_call_operand.hbm [shape: f32[16,2048], index: 7, kind: output, shape index: {}]
  %s8 = sld [smem:[#allocation0]]
  $region61: #{pointer_pegasus_forward.5} parent=0
    _
  %s10 = ssub.s32 1, %s8
  %s11 = scalar_select 0, %s10, %s8
  %s13 = sshll.u32 %s0, 4
  %s14 = int_to_ptr.vmem [resolvable:$true] %s13
  %16 = dma.vmem_to_smem %s14, 16, [#allocation3], [#allocation2]
  %18 = dma.done [#allocation2], 16
  %19 = sfence
  $region1: #{pointer_pegasus_forward.5} parent=0
    #allocation4 [shape = 'u8[16384]{0}', space=vmem, size = 0x4000, scoped, tag = 'output window, operand 0']
    #allocation5 [shape = 's32[2]{0}', space=sflag, size = 0x8, scoped, tag = 'scoped memory for pointer_pegasus_forward.5']
    %20 = vsyncpa [#allocation5], 0
    %s21 = scalar_lea.sflag [#allocation5], 1
    %22 = vsyncpa %s21, 0
    loop: start=0, step=1, limit=18
    $region2: #{pointer_pegasus_forward.5} parent=1 // loop_pre_header
      _
    $region3: #{pointer_pegasus_forward.5} parent=1 // loop_header
      %s24 = sphi 0, %s28
      %p25 = scmp.ge.s32.totalorder %s24, 18
      %s31 = sphi 0, %s43
      %s32 = sphi 0, %s39
      %s33 = sphi 0, %s31
      %s34 = sphi 0, %s32
      %s35 = sphi 0, %s33
      %s36 = sphi 0, %s34
      %s44 = sphi 0, %s44
      %s46 = sphi 0, %s44
      %s47 = sphi 0, %s46
      %s61 = sphi 0, %s47
      %s67 = sphi 0, %s69
      %s70 = sphi 0, %s67
      %s71 = sphi 0, %s70
      %s87 = sphi 0, %s71
      %s93 = sphi 0, %s95
      %s96 = sphi 0, %s93
      %s97 = sphi 0, %s96
      %s113 = sphi 0, %s97
      %s119 = sphi 0, %s121
      %s122 = sphi 0, %s119
      %s123 = sphi 0, %s122
      %s139 = sphi 0, %s123
      %s145 = sphi 0, %s147
      %s148 = sphi 0, %s145
      %s149 = sphi 0, %s148
      %s165 = sphi 0, %s149
      %s173 = sphi 0, %s175
      %s176 = sphi 0, %s173
      %s177 = sphi 0, %s176
      %s193 = sphi 0, %s177
      %s201 = sphi 0, %s203
      %s204 = sphi 0, %s201
      %s205 = sphi 0, %s204
      %s221 = sphi 0, %s205
    $region4: #{pointer_pegasus_forward.5} parent=1 // loop_header_branch
      %27 = sbr.rel (%p25) target = $region8
    $region5: #{pointer_pegasus_forward.5} parent=1 // loop_body
      %s29 = ssub.s32 %s24, 1
      %s30 = ssub.s32 %s24, 2
      %s37 = sadd.s32 1, %s32
      %p38 = scmp.ge.s32.totalorder %s37, 8
      %s39 = scalar_select %p38, 0, %s37
      %s40 = sadd.s32 1, %s31
      %s41 = scalar_select %p38, %s40, %s31
      %p42 = scmp.ge.s32.totalorder %s41, 2
      %s43 = scalar_select %p42, 0, %s41
      %s45 = sadd.s32 %s44, 1
      %p48 = scmp.eq.s32.totalorder %s24, 15
      %p49 = scmp.ne.s32.totalorder %s44, %s46
      %p50 = scmp.eq.s32.totalorder %s24, 0
      %p51 = por %p49, %p50
      %p52 = scmp.ne.s32.totalorder %s44, %s46
      %p53 = scmp.eq.s32.totalorder %s29, 15
      %p54 = por %p52, %p53
      %p55 = scmp.ne.s32.totalorder %s46, %s47
      %p56 = scmp.eq.s32.totalorder %s29, 0
      %p57 = por %p55, %p56
      %p58 = scmp.ne.s32.totalorder %s46, %s47
      %p59 = scmp.eq.s32.totalorder %s30, 15
      %p60 = por %p58, %p59
      %p62 = scmp.ne.s32.totalorder %s47, %s61
      %p63 = scmp.eq.s32.totalorder %s30, 0
      %p64 = por %p62, %p63
      %s65 = ssub.s32 %s31, %s43
      %p66 = scmp.eq.s32.totalorder %s65, 0
      %s68 = sadd.s32 %s67, 1
      %s69 = scalar_select %p66, %s67, %s68
      %p72 = pneg %p66
      %p73 = scmp.eq.s32.totalorder %s24, 15
      %p74 = por %p72, %p73
      %p75 = scmp.ne.s32.totalorder %s67, %s70
      %p76 = scmp.eq.s32.totalorder %s24, 0
      %p77 = por %p75, %p76
      %p78 = scmp.ne.s32.totalorder %s67, %s70
      %p79 = scmp.eq.s32.totalorder %s29, 15
      %p80 = por %p78, %p79
      %p81 = scmp.ne.s32.totalorder %s70, %s71
      %p82 = scmp.eq.s32.totalorder %s29, 0
      %p83 = por %p81, %p82
      %p84 = scmp.ne.s32.totalorder %s70, %s71
      %p85 = scmp.eq.s32.totalorder %s30, 15
      %p86 = por %p84, %p85
      %p88 = scmp.ne.s32.totalorder %s71, %s87
      %p89 = scmp.eq.s32.totalorder %s30, 0
      %p90 = por %p88, %p89
      %s91 = ssub.s32 %s31, %s43
      %p92 = scmp.eq.s32.totalorder %s91, 0
      %s94 = sadd.s32 %s93, 1
      %s95 = scalar_select %p92, %s93, %s94
      %p98 = pneg %p92
      %p99 = scmp.eq.s32.totalorder %s24, 15
      %p100 = por %p98, %p99
      %p101 = scmp.ne.s32.totalorder %s93, %s96
      %p102 = scmp.eq.s32.totalorder %s24, 0
      %p103 = por %p101, %p102
      %p104 = scmp.ne.s32.totalorder %s93, %s96
      %p105 = scmp.eq.s32.totalorder %s29, 15
      %p106 = por %p104, %p105
      %p107 = scmp.ne.s32.totalorder %s96, %s97
      %p108 = scmp.eq.s32.totalorder %s29, 0
      %p109 = por %p107, %p108
      %p110 = scmp.ne.s32.totalorder %s96, %s97
      %p111 = scmp.eq.s32.totalorder %s30, 15
      %p112 = por %p110, %p111
      %p114 = scmp.ne.s32.totalorder %s97, %s113
      %p115 = scmp.eq.s32.totalorder %s30, 0
      %p116 = por %p114, %p115
      %s117 = ssub.s32 %s31, %s43
      %p118 = scmp.eq.s32.totalorder %s117, 0
      %s120 = sadd.s32 %s119, 1
      %s121 = scalar_select %p118, %s119, %s120
      %p124 = pneg %p118
      %p125 = scmp.eq.s32.totalorder %s24, 15
      %p126 = por %p124, %p125
      %p127 = scmp.ne.s32.totalorder %s119, %s122
      %p128 = scmp.eq.s32.totalorder %s24, 0
      %p129 = por %p127, %p128
      %p130 = scmp.ne.s32.totalorder %s119, %s122
      %p131 = scmp.eq.s32.totalorder %s29, 15
      %p132 = por %p130, %p131
      %p133 = scmp.ne.s32.totalorder %s122, %s123
      %p134 = scmp.eq.s32.totalorder %s29, 0
      %p135 = por %p133, %p134
      %p136 = scmp.ne.s32.totalorder %s122, %s123
      %p137 = scmp.eq.s32.totalorder %s30, 15
      %p138 = por %p136, %p137
      %p140 = scmp.ne.s32.totalorder %s123, %s139
      %p141 = scmp.eq.s32.totalorder %s30, 0
      %p142 = por %p140, %p141
      %s143 = ssub.s32 %s31, %s43
      %p144 = scmp.eq.s32.totalorder %s143, 0
      %s146 = sadd.s32 %s145, 1
      %s147 = scalar_select %p144, %s145, %s146
      %p150 = pneg %p144
      %p151 = scmp.eq.s32.totalorder %s24, 15
      %p152 = por %p150, %p151
      %p153 = scmp.ne.s32.totalorder %s145, %s148
      %p154 = scmp.eq.s32.totalorder %s24, 0
      %p155 = por %p153, %p154
      %p156 = scmp.ne.s32.totalorder %s145, %s148
      %p157 = scmp.eq.s32.totalorder %s29, 15
      %p158 = por %p156, %p157
      %p159 = scmp.ne.s32.totalorder %s148, %s149
      %p160 = scmp.eq.s32.totalorder %s29, 0
      %p161 = por %p159, %p160
      %p162 = scmp.ne.s32.totalorder %s148, %s149
      %p163 = scmp.eq.s32.totalorder %s30, 15
      %p164 = por %p162, %p163
      %p166 = scmp.ne.s32.totalorder %s149, %s165
      %p167 = scmp.eq.s32.totalorder %s30, 0
      %p168 = por %p166, %p167
      %s169 = ssub.s32 %s31, %s43
      %s170 = ssub.s32 %s32, %s39
      %s171 = sor.u32 %s169, %s170
      %p172 = scmp.eq.s32.totalorder %s171, 0
      %s174 = sadd.s32 %s173, 1
      %s175 = scalar_select %p172, %s173, %s174
      %p178 = pneg %p172
      %p179 = scmp.eq.s32.totalorder %s24, 15
      %p180 = por %p178, %p179
      %p181 = scmp.ne.s32.totalorder %s173, %s176
      %p182 = scmp.eq.s32.totalorder %s24, 0
      %p183 = por %p181, %p182
      %p184 = scmp.ne.s32.totalorder %s173, %s176
      %p185 = scmp.eq.s32.totalorder %s29, 15
      %p186 = por %p184, %p185
      %p187 = scmp.ne.s32.totalorder %s176, %s177
      %p188 = scmp.eq.s32.totalorder %s29, 0
      %p189 = por %p187, %p188
      %p190 = scmp.ne.s32.totalorder %s176, %s177
      %p191 = scmp.eq.s32.totalorder %s30, 15
      %p192 = por %p190, %p191
      %p194 = scmp.ne.s32.totalorder %s177, %s193
      %p195 = scmp.eq.s32.totalorder %s30, 0
      %p196 = por %p194, %p195
      %s197 = ssub.s32 %s31, %s43
      %s198 = ssub.s32 %s32, %s39
      %s199 = sor.u32 %s197, %s198
      %p200 = scmp.eq.s32.totalorder %s199, 0
      %s202 = sadd.s32 %s201, 1
      %s203 = scalar_select %p200, %s201, %s202
      %p206 = pneg %p200
      %p207 = scmp.eq.s32.totalorder %s24, 15
      %p208 = por %p206, %p207
      %p209 = scmp.ne.s32.totalorder %s201, %s204
      %p210 = scmp.eq.s32.totalorder %s24, 0
      %p211 = por %p209, %p210
      %p212 = scmp.ne.s32.totalorder %s201, %s204
      %p213 = scmp.eq.s32.totalorder %s29, 15
      %p214 = por %p212, %p213
      %p215 = scmp.ne.s32.totalorder %s204, %s205
      %p216 = scmp.eq.s32.totalorder %s29, 0
      %p217 = por %p215, %p216
      %p218 = scmp.ne.s32.totalorder %s204, %s205
      %p219 = scmp.eq.s32.totalorder %s30, 15
      %p220 = por %p218, %p219
      %p222 = scmp.ne.s32.totalorder %s205, %s221
      %p223 = scmp.eq.s32.totalorder %s30, 0
      %p224 = por %p222, %p223
      %p225 = scmp.le.s32.totalorder 1, %s24
      %p226 = scmp.lt.s32.totalorder %s24, 17
      %p227 = pnand %p225, %p226
      %p228 = pneg %p227
      // Predicated region
      $region9: #{pointer_pegasus_forward.5} parent=5 // pred_check
        _
      $region10: #{pointer_pegasus_forward.5} parent=5 // pred_check_branch
        %230 = sbr.rel (%p227) target = $region12
      $region11: #{pointer_pegasus_forward.5} parent=5 // pred_region
        %s231 = ssub.s32 %s24, 1
        // Predicated region
        $region13: #{pointer_pegasus_forward.5} parent=11 // pred_check
          %p232 = pneg %p57
        $region14: #{pointer_pegasus_forward.5} parent=11 // pred_check_branch
          %234 = sbr.rel (%p232) target = $region16
        $region15: #{pointer_pegasus_forward.5} parent=11 // pred_region
          _
        $region16: #{pointer_pegasus_forward.5} parent=11 // pred_fallthru
          _
      $region12: #{pointer_pegasus_forward.5} parent=5 // pred_fallthru
        _
      %p235 = scmp.lt.s32.totalorder %s24, 16
      // Predicated region
      $region17: #{pointer_pegasus_forward.5} parent=5 // pred_check
        %p236 = pneg %p235
      $region18: #{pointer_pegasus_forward.5} parent=5 // pred_check_branch
        %238 = sbr.rel (%p236) target = $region20
      $region19: #{pointer_pegasus_forward.5} parent=5 // pred_region
        // Predicated region
        $region21: #{pointer_pegasus_forward.5} parent=19 // pred_check
          %p239 = pneg %p77
        $region22: #{pointer_pegasus_forward.5} parent=19 // pred_check_branch
          %241 = sbr.rel (%p239) target = $region24
        $region23: #{pointer_pegasus_forward.5} parent=19 // pred_region
          %p242 = scmp.lt.s32.totalorder %s31, 1
          %s243 = scalar_select %p242, %s31, 1
          %s244 = smul.addr %s243, 8
          %s245 = scalar_lea.vmem %s2, %s244
        $region24: #{pointer_pegasus_forward.5} parent=19 // pred_fallthru
          _
        // Predicated region
        $region25: #{pointer_pegasus_forward.5} parent=19 // pred_check
          %p246 = pneg %p103
        $region26: #{pointer_pegasus_forward.5} parent=19 // pred_check_branch
          %248 = sbr.rel (%p246) target = $region28
        $region27: #{pointer_pegasus_forward.5} parent=19 // pred_region
          %p249 = scmp.lt.s32.totalorder %s31, 1
          %s250 = scalar_select %p249, %s31, 1
          %s251 = smul.addr %s250, 8
          %s252 = scalar_lea.vmem %s3, %s251
        $region28: #{pointer_pegasus_forward.5} parent=19 // pred_fallthru
          _
        // Predicated region
        $region29: #{pointer_pegasus_forward.5} parent=19 // pred_check
          %p253 = pneg %p129
        $region30: #{pointer_pegasus_forward.5} parent=19 // pred_check_branch
          %255 = sbr.rel (%p253) target = $region32
        $region31: #{pointer_pegasus_forward.5} parent=19 // pred_region
          %p256 = scmp.lt.s32.totalorder %s31, 1
          %s257 = scalar_select %p256, %s31, 1
          %s258 = smul.addr %s257, 8
          %s259 = scalar_lea.vmem %s4, %s258
        $region32: #{pointer_pegasus_forward.5} parent=19 // pred_fallthru
          _
        // Predicated region
        $region33: #{pointer_pegasus_forward.5} parent=19 // pred_check
          %p260 = pneg %p155
        $region34: #{pointer_pegasus_forward.5} parent=19 // pred_check_branch
          %262 = sbr.rel (%p260) target = $region36
        $region35: #{pointer_pegasus_forward.5} parent=19 // pred_region
          %p263 = scmp.lt.s32.totalorder %s31, 1
          %s264 = scalar_select %p263, %s31, 1
          %s265 = smul.addr %s264, 8
          %s266 = scalar_lea.vmem %s5, %s265
        $region36: #{pointer_pegasus_forward.5} parent=19 // pred_fallthru
          _
        // Predicated region
        $region37: #{pointer_pegasus_forward.5} parent=19 // pred_check
          %p267 = pneg %p183
        $region38: #{pointer_pegasus_forward.5} parent=19 // pred_check_branch
          %269 = sbr.rel (%p267) target = $region40
        $region39: #{pointer_pegasus_forward.5} parent=19 // pred_region
          %s270 = smul.u32 2, %s32
          %p271 = scmp.lt.s32.totalorder %s31, 1
          %s272 = scalar_select %p271, %s31, 1
          %p273 = scmp.lt.s32.totalorder %s270, 15
          %s274 = scalar_select %p273, %s270, 15
          %s275 = smul.addr %s272, 16
          %s276 = sadd.s32 %s274, %s275
          %s277 = smul.addr %s276, 8
          %s278 = scalar_lea.vmem %s6, %s277
          %s279 = smul.u32 2, %s32
        $region40: #{pointer_pegasus_forward.5} parent=19 // pred_fallthru
          _
      $region20: #{pointer_pegasus_forward.5} parent=5 // pred_fallthru
        _
      %p280 = scmp.le.s32.totalorder 1, %s24
      %p281 = scmp.lt.s32.totalorder %s24, 17
      %p282 = pnand %p280, %p281
      %p283 = pneg %p282
      // Predicated region
      $region41: #{pointer_pegasus_forward.5} parent=5 // pred_check
        _
      $region42: #{pointer_pegasus_forward.5} parent=5 // pred_check_branch
        %285 = sbr.rel (%p282) target = $region44
      $region43: #{pointer_pegasus_forward.5} parent=5 // pred_region
        %s286 = ssub.s32 %s24, 1
        %p287 = pneg %p57
        %p288 = pneg %p54
        %p289 = scmp.lt.s32.totalorder %s33, 1
        %s290 = scalar_select %p289, %s33, 1
        %s291 = smul.addr %s290, 8
        %s292 = scalar_lea.vmem %s2, %s291
        %p293 = pneg %p83
        %p294 = pneg %p80
        %p295 = scmp.lt.s32.totalorder %s33, 1
        %s296 = scalar_select %p295, %s33, 1
        %s297 = smul.addr %s296, 8
        %s298 = scalar_lea.vmem %s3, %s297
        %p299 = pneg %p109
        %p300 = pneg %p106
        %p301 = scmp.lt.s32.totalorder %s33, 1
        %s302 = scalar_select %p301, %s33, 1
        %s303 = smul.addr %s302, 8
        %s304 = scalar_lea.vmem %s4, %s303
        %p305 = pneg %p135
        %p306 = pneg %p132
        %p307 = scmp.lt.s32.totalorder %s33, 1
        %s308 = scalar_select %p307, %s33, 1
        %s309 = smul.addr %s308, 8
        %s310 = scalar_lea.vmem %s5, %s309
        %p311 = pneg %p161
        %p312 = pneg %p158
        %s313 = smul.u32 2, %s34
        %p314 = scmp.lt.s32.totalorder %s33, 1
        %s315 = scalar_select %p314, %s33, 1
        %p316 = scmp.lt.s32.totalorder %s313, 15
        %s317 = scalar_select %p316, %s313, 15
        %s318 = smul.addr %s315, 16
        %s319 = sadd.s32 %s317, %s318
        %s320 = smul.addr %s319, 8
        %s321 = scalar_lea.vmem %s6, %s320
        %p322 = pneg %p189
        %p323 = pneg %p186
        %p324 = pneg %p217
        %p325 = pneg %p214
        %s326 = sand.u32 %s204, 1
        %s327 = scalar_lea.sflag [#allocation5], %s326
        %s328 = sand.u32 %s204, 1
        %s329 = smul.addr %s328, 16
        %s330 = scalar_lea.vmem [#allocation4], %s329
        %p331 = scmp.lt.s32.totalorder %s33, 1
        %s332 = scalar_select %p331, %s33, 1
        %s333 = smul.addr %s332, 8
        %s334 = scalar_lea.vmem %s2, %s333
        %p335 = scmp.lt.s32.totalorder %s33, 1
        %s336 = scalar_select %p335, %s33, 1
        %s337 = smul.addr %s336, 8
        %s338 = scalar_lea.vmem %s3, %s337
        %p339 = scmp.lt.s32.totalorder %s33, 1
        %s340 = scalar_select %p339, %s33, 1
        %s341 = smul.addr %s340, 8
        %s342 = scalar_lea.vmem %s4, %s341
        %p343 = scmp.lt.s32.totalorder %s33, 1
        %s344 = scalar_select %p343, %s33, 1
        %s345 = smul.addr %s344, 8
        %s346 = scalar_lea.vmem %s5, %s345
        %s347 = smul.u32 2, %s34
        %p348 = scmp.lt.s32.totalorder %s33, 1
        %s349 = scalar_select %p348, %s33, 1
        %p350 = scmp.lt.s32.totalorder %s347, 15
        %s351 = scalar_select %p350, %s347, 15
        %s352 = smul.addr %s349, 16
        %s353 = sadd.s32 %s351, %s352
        %s354 = smul.addr %s353, 8
        %s355 = scalar_lea.vmem %s6, %s354
        %s356 = smul.u32 2, %s34
        %s357 = smul.u32 2, %s34
        %v358 = vld [vmem:[%s355] sm:$0xff]
        %v359 = vld [vmem:[%s355 + $0x8] sm:$0xff]
        %v360 = vld [vmem:[%s346] sm:$0xff]
        %v361 = vrcp.pop %v360
        %v362 = vmul.f32 %v360, %v361
        %v363 = vsub.f32 1.0, %v362
        %v364 = vmul.f32 %v361, %v363
        %v365 = vadd.f32 %v361, %v364
        %vm366 = vweird.f32 %v360
        %vm367 = vweird.f32 %v361
        %vm368 = vmor %vm366, %vm367
        %v369 = vsel %vm368, %v361, %v365
        %v370 = vand.u32 2147483647, %v360
        %vm371 = vcmp.eq.f32.partialorder %v370, 8.507059e+37
        %v372 = vand.u32 %v360, 2147483648
        %v373 = vor.u32 1.1754944e-38, %v372
        %v374 = vsel %vm371, %v373, %v369
        %v375 = vld [vmem:[%s342] sm:$0xff]
        %377 = vset.pattern.permute.xlu0 0
        %378 = vperm.xlu0 %377, %v375
        %v379 = vpop.permute.xlu0 %378
        %v381 = vsub.f32 %v358, %v379
        %v382 = vsub.f32 %v359, %v379
        %v383 = vmul.f32 %v381, 1.442695
        %v384 = vpow.pop %v383
        %v385 = vmul.f32 %v382, 1.442695
        %v386 = vpow.pop %v385
        %388 = vset.pattern.permute.xlu0 0
        %389 = vperm.xlu0 %388, %v374
        %v390 = vpop.permute.xlu0 %389
        %v392 = vmul.f32 %v384, %v390
        %v393 = vmul.f32 %v386, %v390
        %v394 = vld [vmem:[%s338] sm:$0xff]
        %396 = vset.pattern.permute.xlu0 0
        %397 = vperm.xlu0 %396, %v394
        %v398 = vpop.permute.xlu0 %397
        %v400 = vmul.f32 %v398, %v392
        %v401 = vmul.f32 %v398, %v393
        %402 = vst [vmem:[%s330] sm:$0xff] %v400
        %403 = vst [vmem:[%s330 + $0x8] sm:$0xff] %v401
        %s404 = sld [smem:[#allocation3 + %s34]]
        %p405 = scmp.gt.s32.totalorder %s404, 0
        // Predicated region
        $region45: #{pointer_pegasus_forward.5} parent=43 // pred_check
          %p406 = pneg %p405
        $region46: #{pointer_pegasus_forward.5} parent=43 // pred_check_branch
          %408 = sbr.rel (%p406) target = $region48
        $region47: #{pointer_pegasus_forward.5} parent=43 // pred_region
          %v409 = vlaneseq
          %v410 = vand.u32 %v409, 127
          %v411 = vadd.s32 %v410, 128
          %s412 = smul.u32 %s34, 256
          %v413 = vstv %s412
          %v414 = vadd.s32 %v410, %v413
          %v415 = vadd.s32 %v411, %v413
          %v416 = vld [vmem:[%s1] sm:$0xff]
          %v417 = vld [vmem:[%s1 + $0x8] sm:$0xff]
          %418 = vset.pattern.permute.xlu0 0
          %419 = vperm.xlu0 %418, %v416
          %v420 = vpop.permute.xlu0 %419
          %421 = vset.pattern.permute.xlu0 0
          %422 = vperm.xlu0 %421, %v417
          %v423 = vpop.permute.xlu0 %422
          %vm424 = vcmp.eq.s32.totalorder %v414, %v420
          %vm425 = vcmp.eq.s32.totalorder %v415, %v420
          %vm426 = vcmp.eq.s32.totalorder %v414, %v423
          %vm427 = vcmp.eq.s32.totalorder %v415, %v423
          %v428 = vsel %vm424, 1, 0
          %v429 = vsel %vm425, 1, 0
          %v430 = vsel %vm426, 1, 0
          %v431 = vsel %vm427, 1, 0
          %v432 = vcvt.s32.f32 %v428
          %v433 = vcvt.s32.f32 %v429
          %v434 = vcvt.s32.f32 %v430
          %v435 = vcvt.s32.f32 %v431
          %v436 = vld [vmem:[%s334] sm:$0xff]
          %vm437 = vcmask 130048
          %v439 = vsel %vm437, %v436, 0
          %441 = vmatpush.msra.mxu0 0.0
          %442 = vmatpush.msra.mxu0 0.0
          %443 = vmatpush.msra.mxu0 0.0
          %444 = vmatpush.msra.mxu0 0.0
          %445 = vmatpush.msra.mxu0 0.0
          %446 = vmatpush.msra.mxu0 0.0
          %447 = vmatpush.msra.mxu0 0.0
          %448 = vmatpush.msra.mxu0 0.0
          %449 = vmatpush.msra.mxu0 0.0
          %450 = vmatpush.msra.mxu0 0.0
          %451 = vmatpush.msra.mxu0 0.0
          %452 = vmatpush.msra.mxu0 0.0
          %453 = vmatpush.msra.mxu0 0.0
          %454 = vmatpush.msra.mxu0 0.0
          %455 = vmatpush.msra.mxu0 %v434
          %456 = vmatpush.msra.mxu0 %v432
          %457 = vmatmul.f32.gmra.mxu0 %v439
          %v458 = vpop.f32.mrf.mxu0
          %v459 = vadd.f32 0.0, %v458
          %460 = vdwg.mxu0
          %461 = vmatpush.msra.mxu0 0.0
          %462 = vmatpush.msra.mxu0 0.0
          %463 = vmatpush.msra.mxu0 0.0
          %464 = vmatpush.msra.mxu0 0.0
          %465 = vmatpush.msra.mxu0 0.0
          %466 = vmatpush.msra.mxu0 0.0
          %467 = vmatpush.msra.mxu0 0.0
          %468 = vmatpush.msra.mxu0 0.0
          %469 = vmatpush.msra.mxu0 0.0
          %470 = vmatpush.msra.mxu0 0.0
          %471 = vmatpush.msra.mxu0 0.0
          %472 = vmatpush.msra.mxu0 0.0
          %473 = vmatpush.msra.mxu0 0.0
          %474 = vmatpush.msra.mxu0 0.0
          %475 = vmatpush.msra.mxu0 %v435
          %476 = vmatpush.msra.mxu0 %v433
          %477 = vmatmul.f32.gmra.mxu0 %v439
          %v478 = vpop.f32.mrf.mxu0
          %v479 = vadd.f32 0.0, %v478
          %480 = vdwg.mxu0
          %v481 = vld [vmem:[%s330] sm:$0xff]
          %v482 = vld [vmem:[%s330 + $0x8] sm:$0xff]
          %v483 = vsub.f32 1.0, %v394
          %485 = vset.pattern.permute.xlu0 0
          %486 = vperm.xlu0 %485, %v483
          %v487 = vpop.permute.xlu0 %486
          %v489 = vmul.f32 %v487, %v459
          %v490 = vmul.f32 %v487, %v479
          %v491 = vadd.f32 %v481, %v489
          %v492 = vadd.f32 %v482, %v490
          %493 = vst [vmem:[%s330] sm:$0xff] %v491
          %494 = vst [vmem:[%s330 + $0x8] sm:$0xff] %v492
        $region48: #{pointer_pegasus_forward.5} parent=43 // pred_fallthru
          _
        %s495 = sand.u32 %s204, 1
        %s496 = scalar_lea.sflag [#allocation5], %s495
        %s497 = sand.u32 %s204, 1
        %s498 = smul.addr %s497, 16
        %s499 = scalar_lea.vmem [#allocation4], %s498
        // Predicated region
        $region49: #{pointer_pegasus_forward.5} parent=43 // pred_check
          %p500 = pneg %p214
        $region50: #{pointer_pegasus_forward.5} parent=43 // pred_check_branch
          %502 = sbr.rel (%p500) target = $region52
        $region51: #{pointer_pegasus_forward.5} parent=43 // pred_region
          %s503 = smul.u32 2, %s34
          %505 = vsyncadd %s496, 0
          %s506 = smul.addr %s33, 16
          %s507 = sadd.s32 %s503, %s506
          %s508 = smul.addr %s507, 8
          %s509 = scalar_lea.hbm %s7, %s508
          %s511 = sshll.u32 %s499, 4
          %s512 = int_to_ptr.vmem [resolvable:$true] %s511
          %s513 = sshll.u32 %s509, 4
          %s514 = int_to_ptr.hbm [resolvable:$true] %s513
          %516 = dma.vmem_to_hbm [thread:$0]  %s512, 256, %s514, %s496
        $region52: #{pointer_pegasus_forward.5} parent=43 // pred_fallthru
          _
      $region44: #{pointer_pegasus_forward.5} parent=5 // pred_fallthru
        _
      %p517 = scmp.le.s32.totalorder 2, %s24
      // Predicated region
      $region53: #{pointer_pegasus_forward.5} parent=5 // pred_check
        %p518 = pneg %p517
      $region54: #{pointer_pegasus_forward.5} parent=5 // pred_check_branch
        %520 = sbr.rel (%p518) target = $region56
      $region55: #{pointer_pegasus_forward.5} parent=5 // pred_region
        %s521 = ssub.s32 %s24, 2
        // Predicated region
        $region57: #{pointer_pegasus_forward.5} parent=55 // pred_check
          %p522 = pneg %p220
        $region58: #{pointer_pegasus_forward.5} parent=55 // pred_check_branch
          %524 = sbr.rel (%p522) target = $region60
        $region59: #{pointer_pegasus_forward.5} parent=55 // pred_region
          %s525 = sand.u32 %s205, 1
          %s526 = scalar_lea.sflag [#allocation5], %s525
          %s527 = sand.u32 %s205, 1
          %s528 = smul.addr %s527, 16
          %s529 = scalar_lea.vmem [#allocation4], %s528
          %531 = dma.done %s526, 256
        $region60: #{pointer_pegasus_forward.5} parent=55 // pred_fallthru
          _
      $region56: #{pointer_pegasus_forward.5} parent=5 // pred_fallthru
        _
    $region6: #{pointer_pegasus_forward.5} parent=1 // loop_footer
      %s28 = sadd.s32 1, %s24
    $region7: #{pointer_pegasus_forward.5} parent=1 // loop_footer_branch
      %23 = sbr.rel target = $region3
    $region8: #{pointer_pegasus_forward.5} parent=1 // loop_exit
      _
    %532 = vsyncpa [#allocation5], 1
    %s533 = scalar_lea.sflag [#allocation5], 1
    %534 = vsyncpa %s533, 1

</llo_original>
